<compile_context>
chip_gen: v7x
topology: tpu7x:2x2x1
jax: 0.10.0
libtpu: 0.0.40
codegen_flags: <defaults>
</compile_context>

<pallas_src>
import functools

import jax
import jax.numpy as jnp
import numpy as np
from jax import lax
from jax.experimental import pallas as pl
from jax.experimental.pallas import tpu as pltpu


_VMEM_LIMIT = 48 * 1024 * 1024  # fits v7x's 64 MiB physical VMEM with headroom


def _cparams(dim_sem):
    return pltpu.CompilerParams(dimension_semantics=dim_sem,
                                vmem_limit_bytes=_VMEM_LIMIT)


def _round_up(x, m):
    return (x + m - 1) // m * m


def _apply_act(x, act):
    if act == "none":
        return x
    if act == "relu":
        return jnp.maximum(x, 0)
    if act == "lrelu":  # leaky_relu, negative_slope = 0.2
        return jnp.where(x >= 0, x, 0.2 * x)
    if act == "sigmoid":
        return pl.reciprocal(1.0 + jnp.exp(-x), approx=True)
    raise ValueError(act)


# ----------------------------------------------------------------------------
# Pallas kernels
# ----------------------------------------------------------------------------
def _conv3x3_kernel(x_ref, w_ref, b_ref, *rest, TM, W, Wp, in_act, out_act,
                    has_res):
    # x_ref : (TM+4, Wp, Cin) bf16  padded row-tile (2 extra rows top/bottom,
    #         width padded to Wp = round_up(W+2, 8), zero pad columns)
    # w_ref : (9, Cin, Cout) bf16   taps in (dy, dx) order
    # b_ref : (1, Cout) f32
    # rest  : [res_ref (TM, W, Cout)], o_ref (TM, W, Cout)
    if has_res:
        res_ref, o_ref = rest
    else:
        (o_ref,) = rest
    Cin = x_ref.shape[-1]
    Cout = o_ref.shape[-1]
    L = TM * Wp
    Lb = (TM + 2) * Wp

    x = _apply_act(x_ref[...], in_act)                 # bf16
    x2 = x.reshape((TM + 4) * Wp, Cin)                 # Wp % 8 == 0 -> free

    acc = jnp.zeros((L, Cout), jnp.float32)
    for dx in range(3):
        # one width shift per dx (only dx != 1 is sublane-unaligned),
        # reused by all 3 dy taps via aligned slices below.
        band = x2[Wp + dx - 1: Wp + dx - 1 + Lb, :]
        for dy in range(3):
            acc = acc + jnp.dot(band[dy * Wp: dy * Wp + L, :],
                                w_ref[3 * dy + dx],
                                preferred_element_type=jnp.float32)
    acc = acc + b_ref[...]
    acc = acc.reshape(TM, Wp, Cout)[:, 1:W + 1, :]     # drop junk/pad columns
    if has_res:
        acc = acc + res_ref[...].astype(jnp.float32)   # fused residual add
    acc = _apply_act(acc, out_act)
    o_ref[...] = acc.astype(o_ref.dtype)


def _in_stats_kernel(x_ref, o_ref, *, S, eps):
    # Tiled InstanceNorm statistics: accumulate per-channel sum / sumsq across
    # the spatial reduction grid axis; finalize to (mean, rstd) on last step.
    t = pl.program_id(1)

    @pl.when(t == 0)
    def _():
        o_ref[...] = jnp.zeros_like(o_ref)

    x = x_ref[...].astype(jnp.float32)                  # (TS, C)
    ps = jnp.sum(x, axis=0, keepdims=True)
    psq = jnp.sum(x * x, axis=0, keepdims=True)
    o_ref[...] += jnp.concatenate([ps, psq], axis=0)    # (2, C)

    @pl.when(t == pl.num_programs(1) - 1)
    def _():
        s = o_ref[...]
        mean = s[0:1, :] / S
        var = jnp.maximum(s[1:2, :] / S - mean * mean, 0.0)
        o_ref[...] = jnp.concatenate([mean, lax.rsqrt(var + eps)], axis=0)


def _spade_apply_kernel(x_ref, gb_ref, st_ref, *rest, act, has_proj):
    # out = instance_norm(x) * (1 + gamma) + beta, optional activation, and an
    # optionally fused 1x1 (shortcut) convolution.
    if has_proj:
        w_ref, o_ref = rest
    else:
        (o_ref,) = rest
    C = x_ref.shape[-1]
    x = x_ref[...].astype(jnp.float32)                  # (TS, C)
    mean = st_ref[0:1, :]
    rstd = st_ref[1:2, :]
    gamma = gb_ref[:, :C].astype(jnp.float32)
    beta = gb_ref[:, C:].astype(jnp.float32)
    y = (x - mean) * rstd * (1.0 + gamma) + beta
    y = _apply_act(y, act)
    if has_proj:
        y = jnp.dot(y.astype(jnp.bfloat16), w_ref[...],
                    preferred_element_type=jnp.float32)
    o_ref[...] = y.astype(o_ref.dtype)


# ----------------------------------------------------------------------------
# Pallas call wrappers
# ----------------------------------------------------------------------------
def _pick_tm(H, W):
    if H % 16 == 0 and 16 * W <= 1024:
        return 16
    if H % 8 == 0:
        return 8
    return H


def _pick_ts(S, cap=1024):
    if S <= cap:
        return S
    ts = cap - cap % 8
    while ts >= 8:
        if S % ts == 0:
            return ts
        ts -= 8
    return S


def conv3x3(x, wk, bk, in_act="none", out_act="none", res=None):
    """3x3 'same' conv.  x: (N,H,W,Cin) f32; wk: (9,Cin,Cout) bf16 (prepped);
    bk: (1,Cout) f32; res: optional (N,H,W,Cout) residual added before out_act."""
    N, H, W, Cin = x.shape
    Cout = wk.shape[-1]
    TM = _pick_tm(H, W)
    n_t = H // TM
    Wp = _round_up(W + 2, 8)

    # halo row-tiles (TM + 4 rows each); pad + gather + bf16 cast fuse in XLA.
    xp = jnp.pad(x, ((0, 0), (2, 2), (1, Wp - W - 1), (0, 0)))
    x_tiles = jnp.stack([xp[:, t * TM: t * TM + TM + 4] for t in range(n_t)],
                        axis=1).astype(jnp.bfloat16)    # (N, n_t, TM+4, Wp, Cin)

    in_specs = [
        pl.BlockSpec((None, None, TM + 4, Wp, Cin), lambda n, t: (n, t, 0, 0, 0)),
        pl.BlockSpec((9, Cin, Cout), lambda n, t: (0, 0, 0)),
        pl.BlockSpec((1, Cout), lambda n, t: (0, 0)),
    ]
    args = [x_tiles, wk, bk]
    if res is not None:
        in_specs.append(pl.BlockSpec((None, TM, W, Cout), lambda n, t: (n, t, 0, 0)))
        args.append(res)

    out = pl.pallas_call(
        functools.partial(_conv3x3_kernel, TM=TM, W=W, Wp=Wp,
                          in_act=in_act, out_act=out_act,
                          has_res=res is not None),
        out_shape=jax.ShapeDtypeStruct((N, H, W, Cout), jnp.float32),
        grid=(N, n_t),
        in_specs=in_specs,
        out_specs=pl.BlockSpec((None, TM, W, Cout), lambda n, t: (n, t, 0, 0)),
        compiler_params=_cparams(("parallel", "parallel")),
    )(*args)
    return out


def spade_normalize(x, gb, act="none", proj_w=None, eps=1e-5):
    """InstanceNorm2d(affine=False) + SPADE modulation, optional activation and
    fused 1x1 shortcut conv.  x: (N,H,W,C); gb: (N,H,W,2C) = [gamma | beta]."""
    N, H, W, C = x.shape
    S = H * W
    TS = _pick_ts(S)
    n_t = S // TS
    xf = x.reshape(N, S, C)
    gbf = gb.reshape(N, S, 2 * C)

    stats = pl.pallas_call(
        functools.partial(_in_stats_kernel, S=float(S), eps=eps),
        out_shape=jax.ShapeDtypeStruct((N, 2, C), jnp.float32),
        grid=(N, n_t),
        in_specs=[pl.BlockSpec((None, TS, C), lambda n, t: (n, t, 0))],
        out_specs=pl.BlockSpec((None, 2, C), lambda n, t: (n, 0, 0)),
        compiler_params=_cparams(("parallel", "arbitrary")),
    )(xf)

    Cout = C if proj_w is None else proj_w.shape[-1]
    in_specs = [
        pl.BlockSpec((None, TS, C), lambda n, t: (n, t, 0)),
        pl.BlockSpec((None, TS, 2 * C), lambda n, t: (n, t, 0)),
        pl.BlockSpec((None, 2, C), lambda n, t: (n, 0, 0)),
    ]
    args = [xf, gbf, stats]
    if proj_w is not None:
        in_specs.append(pl.BlockSpec((C, Cout), lambda n, t: (0, 0)))
        args.append(proj_w)

    out = pl.pallas_call(
        functools.partial(_spade_apply_kernel, act=act,
                          has_proj=proj_w is not None),
        out_shape=jax.ShapeDtypeStruct((N, S, Cout), jnp.float32),
        grid=(N, n_t),
        in_specs=in_specs,
        out_specs=pl.BlockSpec((None, TS, Cout), lambda n, t: (n, t, 0)),
        compiler_params=_cparams(("parallel", "parallel")),
    )(*args)
    return out.reshape(N, H, W, Cout)


# ----------------------------------------------------------------------------
# Module glue (mirrors SPADE / SPADEResnetBlock / SPADEDecoder forward)
# ----------------------------------------------------------------------------
def upsample2x(x):
    # nn.Upsample(scale_factor=2), mode='nearest'  (pure data movement)
    return jnp.repeat(jnp.repeat(x, 2, axis=1), 2, axis=2)


def spade(x, segr, p, act="none", proj_w=None):
    # segr is the segmentation map already resized (cached) to x's resolution.
    actv = conv3x3(segr, p["shared_w"], p["shared_b"], out_act="relu")
    gb = conv3x3(actv, p["gb_w"], p["gb_b"])          # fused gamma|beta conv
    return spade_normalize(x, gb, act=act, proj_w=proj_w)


def spade_resblock(x, segr, p):
    if "conv_s_w" in p:  # learned shortcut (fin != fout); 1x1 conv fused in
        x_s = spade(x, segr, p["norm_s"], act="none", proj_w=p["conv_s_w"])
    else:
        x_s = x
    dx = conv3x3(spade(x, segr, p["norm_0"], act="lrelu"),
                 p["conv_0_w"], p["conv_0_b"])
    # residual add fused into conv_1's epilogue
    return conv3x3(spade(dx, segr, p["norm_1"], act="lrelu"),
                   p["conv_1_w"], p["conv_1_b"], res=x_s)


def spade_decoder_forward(feature, p):
    seg1 = feature
    seg2 = upsample2x(seg1)          # seg cached once per scale
    seg4 = upsample2x(seg2)
    x = conv3x3(feature, p["fc_w"], p["fc_b"])
    for i in range(6):
        x = spade_resblock(x, seg1, p[f"G_middle_{i}"])
    x = upsample2x(x)
    x = spade_resblock(x, seg2, p["up_0"])
    x = upsample2x(x)
    x = spade_resblock(x, seg4, p["up_1"])
    return conv3x3(x, p["conv_img_w"], p["conv_img_b"],
                   in_act="lrelu", out_act="sigmoid")


# ----------------------------------------------------------------------------
# Deterministic synthetic parameter init (torch layout) + one-time kernel prep
# ----------------------------------------------------------------------------
def conv_init(key, cout, cin, k):
    kw, kb = jax.random.split(key)
    bound = 1.0 / np.sqrt(cin * k * k)
    w = jax.random.uniform(kw, (cout, cin, k, k), jnp.float32, -bound, bound)
    b = jax.random.uniform(kb, (cout,), jnp.float32, -bound, bound)
    return w, b


def spectral_normalize(key, w):
    # One power iteration with a fresh u, as PyTorch spectral_norm would do on
    # the first forward; applied once at init as a static weight rescale.
    cout = w.shape[0]
    wm = w.reshape(cout, -1)
    u = jax.random.normal(key, (cout,), jnp.float32)
    u = u / (jnp.linalg.norm(u) + 1e-12)
    v = wm.T @ u
    v = v / (jnp.linalg.norm(v) + 1e-12)
    u = wm @ v
    u = u / (jnp.linalg.norm(u) + 1e-12)
    sigma = jnp.dot(u, wm @ v)
    return w / sigma


def prep_conv3(w, b=None):
    # (Cout,Cin,3,3) torch layout -> (9,Cin,Cout) bf16 taps; bias -> (1,Cout) f32
    cout, cin = w.shape[0], w.shape[1]
    wk = jnp.transpose(w, (2, 3, 1, 0)).reshape(9, cin, cout).astype(jnp.bfloat16)
    if b is None:
        bk = jnp.zeros((1, cout), jnp.float32)
    else:
        bk = jnp.asarray(b, jnp.float32).reshape(1, cout)
    return wk, bk


def prep_conv1(w):
    cout, cin = w.shape[0], w.shape[1]
    return jnp.transpose(w.reshape(cout, cin), (1, 0)).astype(jnp.bfloat16)


def init_spade(key, norm_nc, label_nc, nhidden):
    k1, k2, k3 = jax.random.split(key, 3)
    sw, sb = conv_init(k1, nhidden, label_nc, 3)
    gw, gb = conv_init(k2, norm_nc, nhidden, 3)
    bw, bb = conv_init(k3, norm_nc, nhidden, 3)
    shared_w, shared_b = prep_conv3(sw, sb)
    # gamma and beta convolutions fused into one conv with Cout = 2*norm_nc
    gb_w, gb_b = prep_conv3(jnp.concatenate([gw, bw], axis=0),
                            jnp.concatenate([gb, bb], axis=0))
    return dict(shared_w=shared_w, shared_b=shared_b, gb_w=gb_w, gb_b=gb_b)


def init_resblock(key, fin, fout, label_nc, nhidden):
    fmid = min(fin, fout)
    ks = jax.random.split(key, 10)
    w0, b0 = conv_init(ks[0], fmid, fin, 3)
    w1, b1 = conv_init(ks[1], fout, fmid, 3)
    c0w, c0b = prep_conv3(spectral_normalize(ks[2], w0), b0)
    c1w, c1b = prep_conv3(spectral_normalize(ks[3], w1), b1)
    p = dict(conv_0_w=c0w, conv_0_b=c0b, conv_1_w=c1w, conv_1_b=c1b,
             norm_0=init_spade(ks[4], fin, label_nc, nhidden),
             norm_1=init_spade(ks[5], fmid, label_nc, nhidden))
    if fin != fout:
        ws, _ = conv_init(ks[6], fout, fin, 1)     # conv_s has bias=False
        p["conv_s_w"] = prep_conv1(spectral_normalize(ks[7], ws))
        p["norm_s"] = init_spade(ks[8], fin, label_nc, nhidden)
    return p


def init_decoder(key, ic, oc, label_nc, nhidden):
    ks = jax.random.split(key, 10)
    p = {}
    p["fc_w"], p["fc_b"] = prep_conv3(*conv_init(ks[0], 2 * ic, ic, 3))
    for i in range(6):
        p[f"G_middle_{i}"] = init_resblock(ks[1 + i], 2 * ic, 2 * ic,
                                           label_nc, nhidden)
    p["up_0"] = init_resblock(ks[7], 2 * ic, ic, label_nc, nhidden)
    p["up_1"] = init_resblock(ks[8], ic, oc, label_nc, nhidden)
    p["conv_img_w"], p["conv_img_b"] = prep_conv3(*conv_init(ks[9], 3, oc, 3))
    return p


# ----------------------------------------------------------------------------
if __name__ == "__main__":
    key = jax.random.PRNGKey(0)
    kx, kp, kc = jax.random.split(key, 3)

    # Scaled-down stand-ins for the real sizes (ic=256, oc=64, label_nc=256,
    # nhidden=128) so the synthetic script stays small.
    N, H, W = 2, 8, 8
    IC, OC, LABEL_NC, NHIDDEN = 8, 4, 8, 8

    feature = jax.random.normal(kx, (N, H, W, IC), jnp.float32)   # NHWC
    params = init_decoder(kp, IC, OC, LABEL_NC, NHIDDEN)

    # Sanity-check the Pallas conv3x3 kernel against a bf16-matched lax.conv.
    wt, bt = conv_init(kc, 5, IC, 3)
    ref = lax.conv_general_dilated(
        feature.astype(jnp.bfloat16).astype(jnp.float32),
        jnp.transpose(wt, (2, 3, 1, 0)).astype(jnp.bfloat16).astype(jnp.float32),
        (1, 1), "SAME", dimension_numbers=("NHWC", "HWIO", "NHWC")) + bt
    got = conv3x3(feature, *prep_conv3(wt, bt))
    assert jnp.allclose(got, ref, atol=5e-3, rtol=5e-3), "conv3x3 kernel mismatch"

    out = jax.jit(spade_decoder_forward)(feature, params)
    out = jax.block_until_ready(out)
    assert out.shape == (N, 4 * H, 4 * W, 3)
    assert bool(jnp.all(jnp.isfinite(out)))
    print("KERNEL_OK")
</pallas_src>

<mosaic_0001>
module attributes {stable_mosaic.version = 11 : i64} {
  func.func @_conv3x3_kernel(%arg0: i32, %arg1: i32, %arg2: memref<1x1x12x16x8xbf16, #tpu.memory_space<vmem>>, %arg3: memref<9x8x5xbf16, #tpu.memory_space<vmem>>, %arg4: memref<1x5xf32, #tpu.memory_space<vmem>>, %arg5: memref<1x8x8x5xf32, #tpu.memory_space<vmem>>) attributes {dimension_semantics = [#tpu.dimension_semantics<parallel>, #tpu.dimension_semantics<parallel>], iteration_bounds = array<i64: 2, 1>, scalar_prefetch = 0 : i64, scratch_operands = 0 : i64, tpu.core_type = #tpu.core_type<tc>, window_params = [{transform_indices = @transform_0, window_bounds = array<i64: 1, 1, 12, 16, 8>}, {pipeline_mode = #tpu.pipeline_mode<synchronous>, transform_indices = @transform_1, window_bounds = array<i64: 9, 8, 5>}, {pipeline_mode = #tpu.pipeline_mode<synchronous>, transform_indices = @transform_2, window_bounds = array<i64: 1, 5>}, {transform_indices = @transform_3, window_bounds = array<i64: 1, 8, 8, 5>}]} {
    %c0 = arith.constant 0 : index
    %c0_0 = arith.constant 0 : index
    %c0_1 = arith.constant 0 : index
    %c0_2 = arith.constant 0 : index
    %c0_3 = arith.constant 0 : index
    %0 = vector.load %arg2[%c0, %c0_0, %c0_1, %c0_2, %c0_3] : memref<1x1x12x16x8xbf16, #tpu.memory_space<vmem>>, vector<1x1x12x16x8xbf16>
    %1 = vector.shape_cast %0 : vector<1x1x12x16x8xbf16> to vector<12x16x8xbf16>
    %2 = vector.shape_cast %1 : vector<12x16x8xbf16> to vector<192x8xbf16>
    %cst = arith.constant 0.000000e+00 : f32
    %3 = vector.broadcast %cst : f32 to vector<128x5xf32>
    %4 = vector.extract_strided_slice %2 {offsets = [15, 0], sizes = [160, 8], strides = [1, 1]} : vector<192x8xbf16> to vector<160x8xbf16>
    %5 = vector.extract_strided_slice %4 {offsets = [0, 0], sizes = [128, 8], strides = [1, 1]} : vector<160x8xbf16> to vector<128x8xbf16>
    %c0_4 = arith.constant 0 : index
    %c0_5 = arith.constant 0 : index
    %c0_6 = arith.constant 0 : index
    %6 = vector.load %arg3[%c0_4, %c0_5, %c0_6] : memref<9x8x5xbf16, #tpu.memory_space<vmem>>, vector<1x8x5xbf16>
    %7 = vector.shape_cast %6 : vector<1x8x5xbf16> to vector<8x5xbf16>
    %cst_7 = arith.constant dense<0.000000e+00> : vector<128x5xf32>
    %8 = tpu.matmul %5, %7, %cst_7 {dimension_numbers = #tpu.dot_dimension_numbers<[1], [0], [0], [1], [0, 0, 1, 1], [], []>} : vector<128x8xbf16>, vector<8x5xbf16>, vector<128x5xf32> -> vector<128x5xf32>
    %9 = arith.addf %3, %8 : vector<128x5xf32>
    %10 = vector.extract_strided_slice %4 {offsets = [16, 0], sizes = [128, 8], strides = [1, 1]} : vector<160x8xbf16> to vector<128x8xbf16>
    %c3 = arith.constant 3 : index
    %c0_8 = arith.constant 0 : index
    %c0_9 = arith.constant 0 : index
    %11 = vector.load %arg3[%c3, %c0_8, %c0_9] : memref<9x8x5xbf16, #tpu.memory_space<vmem>>, vector<1x8x5xbf16>
    %12 = vector.shape_cast %11 : vector<1x8x5xbf16> to vector<8x5xbf16>
    %cst_10 = arith.constant dense<0.000000e+00> : vector<128x5xf32>
    %13 = tpu.matmul %10, %12, %cst_10 {dimension_numbers = #tpu.dot_dimension_numbers<[1], [0], [0], [1], [0, 0, 1, 1], [], []>} : vector<128x8xbf16>, vector<8x5xbf16>, vector<128x5xf32> -> vector<128x5xf32>
    %14 = arith.addf %9, %13 : vector<128x5xf32>
    %15 = vector.extract_strided_slice %4 {offsets = [32, 0], sizes = [128, 8], strides = [1, 1]} : vector<160x8xbf16> to vector<128x8xbf16>
    %c6 = arith.constant 6 : index
    %c0_11 = arith.constant 0 : index
    %c0_12 = arith.constant 0 : index
    %16 = vector.load %arg3[%c6, %c0_11, %c0_12] : memref<9x8x5xbf16, #tpu.memory_space<vmem>>, vector<1x8x5xbf16>
    %17 = vector.shape_cast %16 : vector<1x8x5xbf16> to vector<8x5xbf16>
    %cst_13 = arith.constant dense<0.000000e+00> : vector<128x5xf32>
    %18 = tpu.matmul %15, %17, %cst_13 {dimension_numbers = #tpu.dot_dimension_numbers<[1], [0], [0], [1], [0, 0, 1, 1], [], []>} : vector<128x8xbf16>, vector<8x5xbf16>, vector<128x5xf32> -> vector<128x5xf32>
    %19 = arith.addf %14, %18 : vector<128x5xf32>
    %20 = vector.extract_strided_slice %2 {offsets = [16, 0], sizes = [160, 8], strides = [1, 1]} : vector<192x8xbf16> to vector<160x8xbf16>
    %21 = vector.extract_strided_slice %20 {offsets = [0, 0], sizes = [128, 8], strides = [1, 1]} : vector<160x8xbf16> to vector<128x8xbf16>
    %c1 = arith.constant 1 : index
    %c0_14 = arith.constant 0 : index
    %c0_15 = arith.constant 0 : index
    %22 = vector.load %arg3[%c1, %c0_14, %c0_15] : memref<9x8x5xbf16, #tpu.memory_space<vmem>>, vector<1x8x5xbf16>
    %23 = vector.shape_cast %22 : vector<1x8x5xbf16> to vector<8x5xbf16>
    %cst_16 = arith.constant dense<0.000000e+00> : vector<128x5xf32>
    %24 = tpu.matmul %21, %23, %cst_16 {dimension_numbers = #tpu.dot_dimension_numbers<[1], [0], [0], [1], [0, 0, 1, 1], [], []>} : vector<128x8xbf16>, vector<8x5xbf16>, vector<128x5xf32> -> vector<128x5xf32>
    %25 = arith.addf %19, %24 : vector<128x5xf32>
    %26 = vector.extract_strided_slice %20 {offsets = [16, 0], sizes = [128, 8], strides = [1, 1]} : vector<160x8xbf16> to vector<128x8xbf16>
    %c4 = arith.constant 4 : index
    %c0_17 = arith.constant 0 : index
    %c0_18 = arith.constant 0 : index
    %27 = vector.load %arg3[%c4, %c0_17, %c0_18] : memref<9x8x5xbf16, #tpu.memory_space<vmem>>, vector<1x8x5xbf16>
    %28 = vector.shape_cast %27 : vector<1x8x5xbf16> to vector<8x5xbf16>
    %cst_19 = arith.constant dense<0.000000e+00> : vector<128x5xf32>
    %29 = tpu.matmul %26, %28, %cst_19 {dimension_numbers = #tpu.dot_dimension_numbers<[1], [0], [0], [1], [0, 0, 1, 1], [], []>} : vector<128x8xbf16>, vector<8x5xbf16>, vector<128x5xf32> -> vector<128x5xf32>
    %30 = arith.addf %25, %29 : vector<128x5xf32>
    %31 = vector.extract_strided_slice %20 {offsets = [32, 0], sizes = [128, 8], strides = [1, 1]} : vector<160x8xbf16> to vector<128x8xbf16>
    %c7 = arith.constant 7 : index
    %c0_20 = arith.constant 0 : index
    %c0_21 = arith.constant 0 : index
    %32 = vector.load %arg3[%c7, %c0_20, %c0_21] : memref<9x8x5xbf16, #tpu.memory_space<vmem>>, vector<1x8x5xbf16>
    %33 = vector.shape_cast %32 : vector<1x8x5xbf16> to vector<8x5xbf16>
    %cst_22 = arith.constant dense<0.000000e+00> : vector<128x5xf32>
    %34 = tpu.matmul %31, %33, %cst_22 {dimension_numbers = #tpu.dot_dimension_numbers<[1], [0], [0], [1], [0, 0, 1, 1], [], []>} : vector<128x8xbf16>, vector<8x5xbf16>, vector<128x5xf32> -> vector<128x5xf32>
    %35 = arith.addf %30, %34 : vector<128x5xf32>
    %36 = vector.extract_strided_slice %2 {offsets = [17, 0], sizes = [160, 8], strides = [1, 1]} : vector<192x8xbf16> to vector<160x8xbf16>
    %37 = vector.extract_strided_slice %36 {offsets = [0, 0], sizes = [128, 8], strides = [1, 1]} : vector<160x8xbf16> to vector<128x8xbf16>
    %c2 = arith.constant 2 : index
    %c0_23 = arith.constant 0 : index
    %c0_24 = arith.constant 0 : index
    %38 = vector.load %arg3[%c2, %c0_23, %c0_24] : memref<9x8x5xbf16, #tpu.memory_space<vmem>>, vector<1x8x5xbf16>
    %39 = vector.shape_cast %38 : vector<1x8x5xbf16> to vector<8x5xbf16>
    %cst_25 = arith.constant dense<0.000000e+00> : vector<128x5xf32>
    %40 = tpu.matmul %37, %39, %cst_25 {dimension_numbers = #tpu.dot_dimension_numbers<[1], [0], [0], [1], [0, 0, 1, 1], [], []>} : vector<128x8xbf16>, vector<8x5xbf16>, vector<128x5xf32> -> vector<128x5xf32>
    %41 = arith.addf %35, %40 : vector<128x5xf32>
    %42 = vector.extract_strided_slice %36 {offsets = [16, 0], sizes = [128, 8], strides = [1, 1]} : vector<160x8xbf16> to vector<128x8xbf16>
    %c5 = arith.constant 5 : index
    %c0_26 = arith.constant 0 : index
    %c0_27 = arith.constant 0 : index
    %43 = vector.load %arg3[%c5, %c0_26, %c0_27] : memref<9x8x5xbf16, #tpu.memory_space<vmem>>, vector<1x8x5xbf16>
    %44 = vector.shape_cast %43 : vector<1x8x5xbf16> to vector<8x5xbf16>
    %cst_28 = arith.constant dense<0.000000e+00> : vector<128x5xf32>
    %45 = tpu.matmul %42, %44, %cst_28 {dimension_numbers = #tpu.dot_dimension_numbers<[1], [0], [0], [1], [0, 0, 1, 1], [], []>} : vector<128x8xbf16>, vector<8x5xbf16>, vector<128x5xf32> -> vector<128x5xf32>
    %46 = arith.addf %41, %45 : vector<128x5xf32>
    %47 = vector.extract_strided_slice %36 {offsets = [32, 0], sizes = [128, 8], strides = [1, 1]} : vector<160x8xbf16> to vector<128x8xbf16>
    %c8 = arith.constant 8 : index
    %c0_29 = arith.constant 0 : index
    %c0_30 = arith.constant 0 : index
    %48 = vector.load %arg3[%c8, %c0_29, %c0_30] : memref<9x8x5xbf16, #tpu.memory_space<vmem>>, vector<1x8x5xbf16>
    %49 = vector.shape_cast %48 : vector<1x8x5xbf16> to vector<8x5xbf16>
    %cst_31 = arith.constant dense<0.000000e+00> : vector<128x5xf32>
    %50 = tpu.matmul %47, %49, %cst_31 {dimension_numbers = #tpu.dot_dimension_numbers<[1], [0], [0], [1], [0, 0, 1, 1], [], []>} : vector<128x8xbf16>, vector<8x5xbf16>, vector<128x5xf32> -> vector<128x5xf32>
    %51 = arith.addf %46, %50 : vector<128x5xf32>
    %c0_32 = arith.constant 0 : index
    %c0_33 = arith.constant 0 : index
    %52 = vector.load %arg4[%c0_32, %c0_33] : memref<1x5xf32, #tpu.memory_space<vmem>>, vector<1x5xf32>
    %53 = vector.broadcast %52 : vector<1x5xf32> to vector<128x5xf32>
    %54 = arith.addf %51, %53 : vector<128x5xf32>
    %55 = vector.shape_cast %54 : vector<128x5xf32> to vector<8x16x5xf32>
    %56 = vector.extract_strided_slice %55 {offsets = [0, 1, 0], sizes = [8, 8, 5], strides = [1, 1, 1]} : vector<8x16x5xf32> to vector<8x8x5xf32>
    %c0_34 = arith.constant 0 : index
    %c0_35 = arith.constant 0 : index
    %c0_36 = arith.constant 0 : index
    %c0_37 = arith.constant 0 : index
    %57 = vector.load %arg5[%c0_34, %c0_35, %c0_36, %c0_37] : memref<1x8x8x5xf32, #tpu.memory_space<vmem>>, vector<1x8x8x5xf32>
    %58 = vector.shape_cast %57 : vector<1x8x8x5xf32> to vector<8x8x5xf32>
    %59 = vector.shape_cast %56 : vector<8x8x5xf32> to vector<1x8x8x5xf32>
    tpu.vector_store %arg5[%c0_34, %c0_35, %c0_36, %c0_37], %59 {strides = array<i32>} : memref<1x8x8x5xf32, #tpu.memory_space<vmem>>, vector<1x8x8x5xf32>,
    return
  }
  func.func @transform_0(%arg0: i32, %arg1: i32) -> (i32, i32, i32, i32, i32) {
    %c0_i32 = arith.constant 0 : i32
    %c0_i32_0 = arith.constant 0 : i32
    %c0_i32_1 = arith.constant 0 : i32
    %c0_i32_2 = arith.constant 0 : i32
    return %arg0, %arg1, %c0_i32, %c0_i32_0, %c0_i32_1 : i32, i32, i32, i32, i32
  }
  func.func @transform_1(%arg0: i32, %arg1: i32) -> (i32, i32, i32) {
    %c0_i32 = arith.constant 0 : i32
    %c0_i32_0 = arith.constant 0 : i32
    %c0_i32_1 = arith.constant 0 : i32
    %c0_i32_2 = arith.constant 0 : i32
    return %c0_i32, %c0_i32_0, %c0_i32_1 : i32, i32, i32
  }
  func.func @transform_2(%arg0: i32, %arg1: i32) -> (i32, i32) {
    %c0_i32 = arith.constant 0 : i32
    %c0_i32_0 = arith.constant 0 : i32
    %c0_i32_1 = arith.constant 0 : i32
    return %c0_i32, %c0_i32_0 : i32, i32
  }
  func.func @transform_3(%arg0: i32, %arg1: i32) -> (i32, i32, i32, i32) {
    %c0_i32 = arith.constant 0 : i32
    %c0_i32_0 = arith.constant 0 : i32
    %c0_i32_1 = arith.constant 0 : i32
    return %arg0, %arg1, %c0_i32, %c0_i32_0 : i32, i32, i32, i32
  }
}

</mosaic_0001>

<llo_original>
// kernel: tpu_custom_call.1
$region0: #{tpu_custom_call.1}
  #allocation0 [shape = 'u32[]', space=smem, size = 0x4, offset = 0x4, fixed_abs, tag = 'smem constant byte address 0x4 - core index']
  #allocation1 [shape = 'u32[144,128]{1,0:T(1,128)}', space=vmem, size = 0x12000, scoped, tag = 'internal scratch']
  %s0 = inlined_call_operand.vmem [shape: bf16[2,1,12,16,8], index: 0, kind: input, shape index: {}]
  %s1 = inlined_call_operand.vmem [shape: bf16[9,8,5], index: 1, kind: input, shape index: {}]
  %s2 = inlined_call_operand.vmem [shape: f32[1,5], index: 2, kind: input, shape index: {}]
  %s3 = inlined_call_operand.vmem [shape: f32[2,8,8,5], index: 3, kind: output, shape index: {}]
  %s4 = sld [smem:[#allocation0]]
  $region45: #{tpu_custom_call.1} parent=0
    _
  %s6 = ssub.s32 1, %s4
  %s7 = scalar_select 0, %s6, %s4
  loop: start=0, step=1, limit=4
  $region2: #{tpu_custom_call.1} parent=0 // loop_pre_header
    _
  $region3: #{tpu_custom_call.1} parent=0 // loop_header
    %s9 = sphi 0, %s13
    %p10 = scmp.ge.s32.totalorder %s9, 4
    %s16 = sphi 0, %s28
    %s17 = sphi 0, %s24
    %s18 = sphi 0, %s16
    %s19 = sphi 0, %s17
    %s20 = sphi 0, %s18
    %s21 = sphi 0, %s19
    %s33 = sphi 0, %s35
    %s36 = sphi 0, %s33
    %s37 = sphi 0, %s36
    %s53 = sphi 0, %s37
    %s57 = sphi 0, %s57
    %s59 = sphi 0, %s57
    %s60 = sphi 0, %s59
    %s74 = sphi 0, %s60
    %s78 = sphi 0, %s78
    %s80 = sphi 0, %s78
    %s81 = sphi 0, %s80
    %s95 = sphi 0, %s81
    %s103 = sphi 0, %s105
    %s106 = sphi 0, %s103
    %s107 = sphi 0, %s106
    %s123 = sphi 0, %s107
  $region4: #{tpu_custom_call.1} parent=0 // loop_header_branch
    %12 = sbr.rel (%p10) target = $region8
  $region5: #{tpu_custom_call.1} parent=0 // loop_body
    %s14 = ssub.s32 %s9, 1
    %s15 = ssub.s32 %s9, 2
    %s22 = sadd.s32 1, %s17
    %p23 = scmp.ge.s32.totalorder %s22, 1
    %s24 = scalar_select %p23, 0, %s22
    %s25 = sadd.s32 1, %s16
    %s26 = scalar_select %p23, %s25, %s16
    %p27 = scmp.ge.s32.totalorder %s26, 2
    %s28 = scalar_select %p27, 0, %s26
    %s29 = ssub.s32 %s16, %s28
    %s30 = ssub.s32 %s17, %s24
    %s31 = sor.u32 %s29, %s30
    %p32 = scmp.eq.s32.totalorder %s31, 0
    %s34 = sadd.s32 %s33, 1
    %s35 = scalar_select %p32, %s33, %s34
    %p38 = pneg %p32
    %p39 = scmp.eq.s32.totalorder %s9, 1
    %p40 = por %p38, %p39
    %p41 = scmp.ne.s32.totalorder %s33, %s36
    %p42 = scmp.eq.s32.totalorder %s9, 0
    %p43 = por %p41, %p42
    %p44 = scmp.ne.s32.totalorder %s33, %s36
    %p45 = scmp.eq.s32.totalorder %s14, 1
    %p46 = por %p44, %p45
    %p47 = scmp.ne.s32.totalorder %s36, %s37
    %p48 = scmp.eq.s32.totalorder %s14, 0
    %p49 = por %p47, %p48
    %p50 = scmp.ne.s32.totalorder %s36, %s37
    %p51 = scmp.eq.s32.totalorder %s15, 1
    %p52 = por %p50, %p51
    %p54 = scmp.ne.s32.totalorder %s37, %s53
    %p55 = scmp.eq.s32.totalorder %s15, 0
    %p56 = por %p54, %p55
    %s58 = sadd.s32 %s57, 1
    %p61 = scmp.eq.s32.totalorder %s9, 1
    %p62 = scmp.ne.s32.totalorder %s57, %s59
    %p63 = scmp.eq.s32.totalorder %s9, 0
    %p64 = por %p62, %p63
    %p65 = scmp.ne.s32.totalorder %s57, %s59
    %p66 = scmp.eq.s32.totalorder %s14, 1
    %p67 = por %p65, %p66
    %p68 = scmp.ne.s32.totalorder %s59, %s60
    %p69 = scmp.eq.s32.totalorder %s14, 0
    %p70 = por %p68, %p69
    %p71 = scmp.ne.s32.totalorder %s59, %s60
    %p72 = scmp.eq.s32.totalorder %s15, 1
    %p73 = por %p71, %p72
    %p75 = scmp.ne.s32.totalorder %s60, %s74
    %p76 = scmp.eq.s32.totalorder %s15, 0
    %p77 = por %p75, %p76
    %s79 = sadd.s32 %s78, 1
    %p82 = scmp.eq.s32.totalorder %s9, 1
    %p83 = scmp.ne.s32.totalorder %s78, %s80
    %p84 = scmp.eq.s32.totalorder %s9, 0
    %p85 = por %p83, %p84
    %p86 = scmp.ne.s32.totalorder %s78, %s80
    %p87 = scmp.eq.s32.totalorder %s14, 1
    %p88 = por %p86, %p87
    %p89 = scmp.ne.s32.totalorder %s80, %s81
    %p90 = scmp.eq.s32.totalorder %s14, 0
    %p91 = por %p89, %p90
    %p92 = scmp.ne.s32.totalorder %s80, %s81
    %p93 = scmp.eq.s32.totalorder %s15, 1
    %p94 = por %p92, %p93
    %p96 = scmp.ne.s32.totalorder %s81, %s95
    %p97 = scmp.eq.s32.totalorder %s15, 0
    %p98 = por %p96, %p97
    %s99 = ssub.s32 %s16, %s28
    %s100 = ssub.s32 %s17, %s24
    %s101 = sor.u32 %s99, %s100
    %p102 = scmp.eq.s32.totalorder %s101, 0
    %s104 = sadd.s32 %s103, 1
    %s105 = scalar_select %p102, %s103, %s104
    %p108 = pneg %p102
    %p109 = scmp.eq.s32.totalorder %s9, 1
    %p110 = por %p108, %p109
    %p111 = scmp.ne.s32.totalorder %s103, %s106
    %p112 = scmp.eq.s32.totalorder %s9, 0
    %p113 = por %p111, %p112
    %p114 = scmp.ne.s32.totalorder %s103, %s106
    %p115 = scmp.eq.s32.totalorder %s14, 1
    %p116 = por %p114, %p115
    %p117 = scmp.ne.s32.totalorder %s106, %s107
    %p118 = scmp.eq.s32.totalorder %s14, 0
    %p119 = por %p117, %p118
    %p120 = scmp.ne.s32.totalorder %s106, %s107
    %p121 = scmp.eq.s32.totalorder %s15, 1
    %p122 = por %p120, %p121
    %p124 = scmp.ne.s32.totalorder %s107, %s123
    %p125 = scmp.eq.s32.totalorder %s15, 0
    %p126 = por %p124, %p125
    %p127 = scmp.le.s32.totalorder 1, %s9
    %p128 = scmp.lt.s32.totalorder %s9, 3
    %p129 = pnand %p127, %p128
    %p130 = pneg %p129
    // Predicated region
    $region9: #{tpu_custom_call.1} parent=5 // pred_check
      _
    $region10: #{tpu_custom_call.1} parent=5 // pred_check_branch
      %132 = sbr.rel (%p129) target = $region12
    $region11: #{tpu_custom_call.1} parent=5 // pred_region
      %s133 = ssub.s32 %s9, 1
      // Predicated region
      $region13: #{tpu_custom_call.1} parent=11 // pred_check
        %p134 = pneg %p70
      $region14: #{tpu_custom_call.1} parent=11 // pred_check_branch
        %136 = sbr.rel (%p134) target = $region16
      $region15: #{tpu_custom_call.1} parent=11 // pred_region
        _
      $region16: #{tpu_custom_call.1} parent=11 // pred_fallthru
        _
      // Predicated region
      $region17: #{tpu_custom_call.1} parent=11 // pred_check
        %p137 = pneg %p91
      $region18: #{tpu_custom_call.1} parent=11 // pred_check_branch
        %139 = sbr.rel (%p137) target = $region20
      $region19: #{tpu_custom_call.1} parent=11 // pred_region
        _
      $region20: #{tpu_custom_call.1} parent=11 // pred_fallthru
        _
    $region12: #{tpu_custom_call.1} parent=5 // pred_fallthru
      _
    %p140 = scmp.lt.s32.totalorder %s9, 2
    // Predicated region
    $region21: #{tpu_custom_call.1} parent=5 // pred_check
      %p141 = pneg %p140
    $region22: #{tpu_custom_call.1} parent=5 // pred_check_branch
      %143 = sbr.rel (%p141) target = $region24
    $region23: #{tpu_custom_call.1} parent=5 // pred_region
      // Predicated region
      $region25: #{tpu_custom_call.1} parent=23 // pred_check
        %p144 = pneg %p43
      $region26: #{tpu_custom_call.1} parent=23 // pred_check_branch
        %146 = sbr.rel (%p144) target = $region28
      $region27: #{tpu_custom_call.1} parent=23 // pred_region
        %p147 = scmp.lt.s32.totalorder %s16, 1
        %s148 = scalar_select %p147, %s16, 1
        %p149 = scmp.lt.s32.totalorder %s17, 0
        %s150 = scalar_select %p149, %s17, 0
        %s151 = smul.addr %s150, 24
        %s152 = smul.addr %s148, 24
        %s153 = sadd.s32 %s151, %s152
        %s154 = smul.addr %s153, 4
        %s155 = scalar_lea.vmem %s0, %s154
      $region28: #{tpu_custom_call.1} parent=23 // pred_fallthru
        _
    $region24: #{tpu_custom_call.1} parent=5 // pred_fallthru
      _
    %p156 = scmp.le.s32.totalorder 1, %s9
    %p157 = scmp.lt.s32.totalorder %s9, 3
    %p158 = pnand %p156, %p157
    %p159 = pneg %p158
    // Predicated region
    $region29: #{tpu_custom_call.1} parent=5 // pred_check
      _
    $region30: #{tpu_custom_call.1} parent=5 // pred_check_branch
      %161 = sbr.rel (%p158) target = $region32
    $region31: #{tpu_custom_call.1} parent=5 // pred_region
      %s162 = ssub.s32 %s9, 1
      %p163 = scmp.lt.s32.totalorder %s18, 1
      %s164 = scalar_select %p163, %s18, 1
      %p165 = scmp.lt.s32.totalorder %s19, 0
      %s166 = scalar_select %p165, %s19, 0
      %s167 = smul.addr %s166, 24
      %s168 = smul.addr %s164, 24
      %s169 = sadd.s32 %s167, %s168
      %s170 = smul.addr %s169, 4
      %s171 = scalar_lea.vmem %s0, %s170
      %p172 = pneg %p49
      %p173 = pneg %p46
      %p174 = pneg %p70
      %p175 = pneg %p67
      %p176 = pneg %p91
      %p177 = pneg %p88
      %p178 = pneg %p119
      %p179 = pneg %p116
      %s180 = smul.u32 8, %s19
      %p181 = scmp.lt.s32.totalorder %s18, 1
      %s182 = scalar_select %p181, %s18, 1
      %p183 = scmp.lt.s32.totalorder %s180, 7
      %s184 = scalar_select %p183, %s180, 7
      %s185 = smul.addr %s182, 8
      %s186 = sadd.s32 %s184, %s185
      %s187 = smul.addr %s186, 8
      %s188 = scalar_lea.vmem %s3, %s187
      %p189 = scmp.lt.s32.totalorder %s18, 1
      %s190 = scalar_select %p189, %s18, 1
      %p191 = scmp.lt.s32.totalorder %s19, 0
      %s192 = scalar_select %p191, %s19, 0
      %s193 = smul.addr %s192, 24
      %s194 = smul.addr %s190, 24
      %s195 = sadd.s32 %s193, %s194
      %s196 = smul.addr %s195, 4
      %s197 = scalar_lea.vmem %s0, %s196
      %s198 = smul.u32 8, %s19
      %p199 = scmp.lt.s32.totalorder %s18, 1
      %s200 = scalar_select %p199, %s18, 1
      %p201 = scmp.lt.s32.totalorder %s198, 7
      %s202 = scalar_select %p201, %s198, 7
      %s203 = smul.addr %s200, 8
      %s204 = sadd.s32 %s202, %s203
      %s205 = smul.addr %s204, 8
      %s206 = scalar_lea.vmem %s3, %s205
      %s207 = smul.u32 8, %s19
      %v209 = vld [vmem:[%s197 + $0x4] sm:$0xf]
      %v210 = vld [vmem:[%s197 + $0x8] sm:$0xf]
      %v211 = vld [vmem:[%s197 + $0xc] sm:$0xf]
      %v212 = vld [vmem:[%s197 + $0x10] sm:$0xf]
      %v213 = vld [vmem:[%s197 + $0x14] sm:$0xf]
      %v214 = vld [vmem:[%s197 + $0x18] sm:$0xf]
      %v215 = vld [vmem:[%s197 + $0x1c] sm:$0xf]
      %v216 = vld [vmem:[%s197 + $0x20] sm:$0xf]
      %v217 = vld [vmem:[%s197 + $0x24] sm:$0xf]
      %v218 = vld [vmem:[%s197 + $0x28] sm:$0xf]
      %v219 = vld [vmem:[%s197 + $0x2c] sm:$0xf]
      %v220 = vld [vmem:[%s197 + $0x30] sm:$0xf]
      %v221 = vld [vmem:[%s197 + $0x34] sm:$0xf]
      %v222 = vld [vmem:[%s197 + $0x38] sm:$0xf]
      %v223 = vld [vmem:[%s197 + $0x3c] sm:$0xf]
      %v224 = vld [vmem:[%s197 + $0x40] sm:$0xf]
      %v225 = vld [vmem:[%s197 + $0x44] sm:$0xf]
      %v226 = vld [vmem:[%s197 + $0x48] sm:$0xf]
      %v227 = vld [vmem:[%s197 + $0x4c] sm:$0xf]
      %v228 = vld [vmem:[%s197 + $0x50] sm:$0xf]
      %v229 = vld [vmem:[%s197 + $0x54] sm:$0xf]
      %v230 = vld [vmem:[%s197 + $0x58] sm:$0xf]
      %v231 = vld [vmem:[%s1] sm:$0xf]
      %s232 = scalar_lea.vmem %s1, 12
      %v233 = vld [vmem:[%s232] sm:$0xf]
      %v251 = vunpack.c.l.b16 %v211
      %v252 = vunpack.c.l.b16 %v212
      %v253 = vunpack.c.l.b16 %v213
      %v254 = vunpack.c.l.b16 %v214
      %v255 = vunpack.c.l.b16 %v215
      %v256 = vunpack.c.l.b16 %v216
      %v257 = vunpack.c.l.b16 %v217
      %v258 = vunpack.c.l.b16 %v218
      %v259 = vunpack.c.l.b16 %v219
      %v260 = vunpack.c.l.b16 %v220
      %v261 = vunpack.c.l.b16 %v221
      %v262 = vunpack.c.l.b16 %v222
      %v263 = vunpack.c.l.b16 %v223
      %v264 = vunpack.c.l.b16 %v224
      %v265 = vunpack.c.l.b16 %v225
      %v266 = vunpack.c.l.b16 %v226
      %v267 = vunpack.c.l.b16 %v227
      %v268 = vpack.c.b16 %v252, %v251
      %v269 = vpack.c.b16 %v254, %v253
      %v270 = vpack.c.b16 %v256, %v255
      %v271 = vpack.c.b16 %v258, %v257
      %v272 = vpack.c.b16 %v260, %v259
      %v273 = vpack.c.b16 %v262, %v261
      %v274 = vpack.c.b16 %v264, %v263
      %v275 = vpack.c.b16 %v266, %v265
      %v276 = vpack.c.b16 %v267, %v267
      %vm277 = vsmask.f32 4352
      %v279 = vshrl.u32 %v268, 16
      %v281 = vrot.slane %v279, 3
      %v282 = vshll.u32 %v268, 16
      %v284 = vrot.slane %v282, 4
      %v285 = vor.u32 %v281, %v284
      %v287 = vshrl.u32 %v269, 16
      %v289 = vrot.slane %v287, 3
      %v290 = vshll.u32 %v269, 16
      %v292 = vrot.slane %v290, 4
      %v293 = vor.u32 %v289, %v292
      %v294 = vsel %vm277, %v285, %v293
      %v296 = vshrl.u32 %v270, 16
      %v298 = vrot.slane %v296, 3
      %v299 = vshll.u32 %v270, 16
      %v301 = vrot.slane %v299, 4
      %v302 = vor.u32 %v298, %v301
      %v303 = vsel %vm277, %v293, %v302
      %v305 = vshrl.u32 %v271, 16
      %v307 = vrot.slane %v305, 3
      %v308 = vshll.u32 %v271, 16
      %v310 = vrot.slane %v308, 4
      %v311 = vor.u32 %v307, %v310
      %v312 = vsel %vm277, %v302, %v311
      %v314 = vshrl.u32 %v272, 16
      %v316 = vrot.slane %v314, 3
      %v317 = vshll.u32 %v272, 16
      %v319 = vrot.slane %v317, 4
      %v320 = vor.u32 %v316, %v319
      %v321 = vsel %vm277, %v311, %v320
      %v323 = vshrl.u32 %v273, 16
      %v325 = vrot.slane %v323, 3
      %v326 = vshll.u32 %v273, 16
      %v328 = vrot.slane %v326, 4
      %v329 = vor.u32 %v325, %v328
      %v330 = vsel %vm277, %v320, %v329
      %v332 = vshrl.u32 %v274, 16
      %v334 = vrot.slane %v332, 3
      %v335 = vshll.u32 %v274, 16
      %v337 = vrot.slane %v335, 4
      %v338 = vor.u32 %v334, %v337
      %v339 = vsel %vm277, %v329, %v338
      %v341 = vshrl.u32 %v275, 16
      %v343 = vrot.slane %v341, 3
      %v344 = vshll.u32 %v275, 16
      %v346 = vrot.slane %v344, 4
      %v347 = vor.u32 %v343, %v346
      %v348 = vsel %vm277, %v338, %v347
      %v350 = vshrl.u32 %v276, 16
      %v352 = vrot.slane %v350, 3
      %v353 = vshll.u32 %v276, 16
      %v355 = vrot.slane %v353, 4
      %v356 = vor.u32 %v352, %v355
      %v357 = vsel %vm277, %v347, %v356
      %vm358 = vcmask 64512
      %v360 = vsel %vm358, %v294, 0
      %v363 = vsel %vm358, %v303, 0
      %v366 = vsel %vm358, %v312, 0
      %v369 = vsel %vm358, %v321, 0
      %v372 = vsel %vm358, %v330, 0
      %v375 = vsel %vm358, %v339, 0
      %v378 = vsel %vm358, %v348, 0
      %v381 = vsel %vm358, %v357, 0
      %vm383 = vcmask 1043456
      %v385 = vsel %vm383, %v233, 0
      %387 = vmatprep.subr.bf16.mxu0 0
      %388 = vmatpush1.bf16.msra.mxu0 %v385
      %389 = vmatprep.subr.bf16.mxu0 0
      %390 = vmatpush1.bf16.msra.mxu0 0
      %391 = vmatprep.subr.bf16.mxu0 0
      %392 = vmatpush1.bf16.msra.mxu0 0
      %393 = vmatprep.subr.bf16.mxu0 0
      %394 = vmatpush1.bf16.msra.mxu0 0
      %395 = vmatprep.subr.bf16.mxu0 0
      %396 = vmatpush1.bf16.msra.mxu0 0
      %397 = vmatprep.subr.bf16.mxu0 0
      %398 = vmatpush1.bf16.msra.mxu0 0
      %399 = vmatprep.subr.bf16.mxu0 0
      %400 = vmatpush1.bf16.msra.mxu0 0
      %401 = vmatprep.subr.bf16.mxu0 0
      %402 = vmatpush1.bf16.msra.mxu0 0
      %403 = vmatprep.subr.bf16.mxu0 0
      %404 = vmatpush1.bf16.msra.mxu0 0
      %405 = vmatprep.subr.bf16.mxu0 0
      %406 = vmatpush1.bf16.msra.mxu0 0
      %407 = vmatprep.subr.bf16.mxu0 0
      %408 = vmatpush1.bf16.msra.mxu0 0
      %409 = vmatprep.subr.bf16.mxu0 0
      %410 = vmatpush1.bf16.msra.mxu0 0
      %411 = vmatprep.subr.bf16.mxu0 0
      %412 = vmatpush1.bf16.msra.mxu0 0
      %413 = vmatprep.subr.bf16.mxu0 0
      %414 = vmatpush1.bf16.msra.mxu0 0
      %415 = vmatprep.subr.bf16.mxu0 0
      %416 = vmatpush1.bf16.msra.mxu0 0
      %417 = vmatprep.subr.bf16.mxu0 0
      %418 = vmatpush1.bf16.msra.mxu0 0
      %419 = vmatprep.mubr.bf16.mxu0 0
      %420 = vmatmul.mubr.bf16.gmra.mrb[0].mxu0 %v360
      %v421 = vpop.f32.mrb[0].mxu0
      %v422 = vadd.f32 0.0, %v421
      %v423 = vpop.f32.mrb[0].mxu0
      %v424 = vpop.f32.mrb[0].mxu0
      %v425 = vadd.f32 0.0, %v424
      %v426 = vpop.f32.mrb[0].mxu0
      %427 = vmatprep.mubr.bf16.mxu0 0
      %428 = vmatmul.mubr.bf16.gmra.mrb[0].mxu0 %v363
      %v429 = vpop.f32.mrb[0].mxu0
      %v430 = vadd.f32 0.0, %v429
      %v431 = vpop.f32.mrb[0].mxu0
      %v432 = vpop.f32.mrb[0].mxu0
      %v433 = vadd.f32 0.0, %v432
      %v434 = vpop.f32.mrb[0].mxu0
      %435 = vmatprep.mubr.bf16.mxu0 0
      %436 = vmatmul.mubr.bf16.gmra.mrb[0].mxu0 %v366
      %v437 = vpop.f32.mrb[0].mxu0
      %v438 = vadd.f32 0.0, %v437
      %v439 = vpop.f32.mrb[0].mxu0
      %v440 = vpop.f32.mrb[0].mxu0
      %v441 = vadd.f32 0.0, %v440
      %v442 = vpop.f32.mrb[0].mxu0
      %443 = vmatprep.mubr.bf16.mxu0 0
      %444 = vmatmul.mubr.bf16.gmra.mrb[0].mxu0 %v369
      %v445 = vpop.f32.mrb[0].mxu0
      %v446 = vadd.f32 0.0, %v445
      %v447 = vpop.f32.mrb[0].mxu0
      %v448 = vpop.f32.mrb[0].mxu0
      %v449 = vadd.f32 0.0, %v448
      %v450 = vpop.f32.mrb[0].mxu0
      %451 = vmatprep.mubr.bf16.mxu0 0
      %452 = vmatmul.mubr.bf16.gmra.mrb[0].mxu0 %v372
      %v453 = vpop.f32.mrb[0].mxu0
      %v454 = vadd.f32 0.0, %v453
      %v455 = vpop.f32.mrb[0].mxu0
      %v456 = vpop.f32.mrb[0].mxu0
      %v457 = vadd.f32 0.0, %v456
      %v458 = vpop.f32.mrb[0].mxu0
      %459 = vmatprep.mubr.bf16.mxu0 0
      %460 = vmatmul.mubr.bf16.gmra.mrb[0].mxu0 %v375
      %v461 = vpop.f32.mrb[0].mxu0
      %v462 = vadd.f32 0.0, %v461
      %v463 = vpop.f32.mrb[0].mxu0
      %v464 = vpop.f32.mrb[0].mxu0
      %v465 = vadd.f32 0.0, %v464
      %v466 = vpop.f32.mrb[0].mxu0
      %467 = vmatprep.mubr.bf16.mxu0 0
      %468 = vmatmul.mubr.bf16.gmra.mrb[0].mxu0 %v378
      %v469 = vpop.f32.mrb[0].mxu0
      %v470 = vadd.f32 0.0, %v469
      %v471 = vpop.f32.mrb[0].mxu0
      %v472 = vpop.f32.mrb[0].mxu0
      %v473 = vadd.f32 0.0, %v472
      %v474 = vpop.f32.mrb[0].mxu0
      %475 = vmatprep.mubr.bf16.mxu0 0
      %476 = vmatmul.mubr.bf16.gmra.mrb[0].mxu0 %v381
      %v477 = vpop.f32.mrb[0].mxu0
      %v478 = vadd.f32 0.0, %v477
      %v479 = vpop.f32.mrb[0].mxu0
      %v480 = vpop.f32.mrb[0].mxu0
      %v481 = vadd.f32 0.0, %v480
      %v482 = vpop.f32.mrb[0].mxu0
      %483 = vdwg.mxu0
      %v486 = vunpack.c.l.b16 %v209
      %v487 = vunpack.c.l.b16 %v210
      %v488 = vpack.c.b16 %v487, %v486
      %v489 = vpack.c.b16 %v265, %v265
      %v491 = vshrl.u32 %v488, 16
      %v493 = vrot.slane %v491, 3
      %v494 = vshll.u32 %v488, 16
      %v496 = vrot.slane %v494, 4
      %v497 = vor.u32 %v493, %v496
      %v498 = vsel %vm277, %v497, %v285
      %v500 = vshrl.u32 %v489, 16
      %v502 = vrot.slane %v500, 3
      %v503 = vshll.u32 %v489, 16
      %v505 = vrot.slane %v503, 4
      %v506 = vor.u32 %v502, %v505
      %v507 = vsel %vm277, %v338, %v506
      %v509 = vsel %vm358, %v498, 0
      %v512 = vsel %vm358, %v507, 0
      %v515 = vsel %vm383, %v231, 0
      %517 = vmatprep.subr.bf16.mxu0 0
      %518 = vmatpush1.bf16.msra.mxu0 %v515
      %519 = vmatprep.subr.bf16.mxu0 0
      %520 = vmatpush1.bf16.msra.mxu0 0
      %521 = vmatprep.subr.bf16.mxu0 0
      %522 = vmatpush1.bf16.msra.mxu0 0
      %523 = vmatprep.subr.bf16.mxu0 0
      %524 = vmatpush1.bf16.msra.mxu0 0
      %525 = vmatprep.subr.bf16.mxu0 0
      %526 = vmatpush1.bf16.msra.mxu0 0
      %527 = vmatprep.subr.bf16.mxu0 0
      %528 = vmatpush1.bf16.msra.mxu0 0
      %529 = vmatprep.subr.bf16.mxu0 0
      %530 = vmatpush1.bf16.msra.mxu0 0
      %531 = vmatprep.subr.bf16.mxu0 0
      %532 = vmatpush1.bf16.msra.mxu0 0
      %533 = vmatprep.subr.bf16.mxu0 0
      %534 = vmatpush1.bf16.msra.mxu0 0
      %535 = vmatprep.subr.bf16.mxu0 0
      %536 = vmatpush1.bf16.msra.mxu0 0
      %537 = vmatprep.subr.bf16.mxu0 0
      %538 = vmatpush1.bf16.msra.mxu0 0
      %539 = vmatprep.subr.bf16.mxu0 0
      %540 = vmatpush1.bf16.msra.mxu0 0
      %541 = vmatprep.subr.bf16.mxu0 0
      %542 = vmatpush1.bf16.msra.mxu0 0
      %543 = vmatprep.subr.bf16.mxu0 0
      %544 = vmatpush1.bf16.msra.mxu0 0
      %545 = vmatprep.subr.bf16.mxu0 0
      %546 = vmatpush1.bf16.msra.mxu0 0
      %547 = vmatprep.subr.bf16.mxu0 0
      %548 = vmatpush1.bf16.msra.mxu0 0
      %549 = vmatprep.mubr.bf16.mxu0 0
      %550 = vmatmul.mubr.bf16.gmra.mrb[0].mxu0 %v509
      %v551 = vpop.f32.mrb[0].mxu0
      %v552 = vadd.f32 %v422, %v551
      %v553 = vpop.f32.mrb[0].mxu0
      %v554 = vpop.f32.mrb[0].mxu0
      %v555 = vadd.f32 %v425, %v554
      %v556 = vpop.f32.mrb[0].mxu0
      %557 = vmatprep.mubr.bf16.mxu0 0
      %558 = vmatmul.mubr.bf16.gmra.mrb[0].mxu0 %v360
      %v559 = vpop.f32.mrb[0].mxu0
      %v560 = vadd.f32 %v430, %v559
      %v561 = vpop.f32.mrb[0].mxu0
      %v562 = vpop.f32.mrb[0].mxu0
      %v563 = vadd.f32 %v433, %v562
      %v564 = vpop.f32.mrb[0].mxu0
      %565 = vmatprep.mubr.bf16.mxu0 0
      %566 = vmatmul.mubr.bf16.gmra.mrb[0].mxu0 %v363
      %v567 = vpop.f32.mrb[0].mxu0
      %v568 = vadd.f32 %v438, %v567
      %v569 = vpop.f32.mrb[0].mxu0
      %v570 = vpop.f32.mrb[0].mxu0
      %v571 = vadd.f32 %v441, %v570
      %v572 = vpop.f32.mrb[0].mxu0
      %573 = vmatprep.mubr.bf16.mxu0 0
      %574 = vmatmul.mubr.bf16.gmra.mrb[0].mxu0 %v366
      %v575 = vpop.f32.mrb[0].mxu0
      %v576 = vadd.f32 %v446, %v575
      %v577 = vpop.f32.mrb[0].mxu0
      %v578 = vpop.f32.mrb[0].mxu0
      %v579 = vadd.f32 %v449, %v578
      %v580 = vpop.f32.mrb[0].mxu0
      %581 = vmatprep.mubr.bf16.mxu0 0
      %582 = vmatmul.mubr.bf16.gmra.mrb[0].mxu0 %v369
      %v583 = vpop.f32.mrb[0].mxu0
      %v584 = vadd.f32 %v454, %v583
      %v585 = vpop.f32.mrb[0].mxu0
      %v586 = vpop.f32.mrb[0].mxu0
      %v587 = vadd.f32 %v457, %v586
      %v588 = vpop.f32.mrb[0].mxu0
      %589 = vmatprep.mubr.bf16.mxu0 0
      %590 = vmatmul.mubr.bf16.gmra.mrb[0].mxu0 %v372
      %v591 = vpop.f32.mrb[0].mxu0
      %v592 = vadd.f32 %v462, %v591
      %v593 = vpop.f32.mrb[0].mxu0
      %v594 = vpop.f32.mrb[0].mxu0
      %v595 = vadd.f32 %v465, %v594
      %v596 = vpop.f32.mrb[0].mxu0
      %597 = vmatprep.mubr.bf16.mxu0 0
      %598 = vmatmul.mubr.bf16.gmra.mrb[0].mxu0 %v375
      %v599 = vpop.f32.mrb[0].mxu0
      %v600 = vadd.f32 %v470, %v599
      %v601 = vpop.f32.mrb[0].mxu0
      %v602 = vpop.f32.mrb[0].mxu0
      %v603 = vadd.f32 %v473, %v602
      %v604 = vpop.f32.mrb[0].mxu0
      %605 = vmatprep.mubr.bf16.mxu0 0
      %606 = vmatmul.mubr.bf16.gmra.mrb[0].mxu0 %v512
      %v607 = vpop.f32.mrb[0].mxu0
      %v608 = vadd.f32 %v478, %v607
      %v609 = vpop.f32.mrb[0].mxu0
      %v610 = vpop.f32.mrb[0].mxu0
      %v611 = vadd.f32 %v481, %v610
      %v612 = vpop.f32.mrb[0].mxu0
      %613 = vdwg.mxu0
      %s614 = scalar_lea.vmem %s1, 24
      %v615 = vld [vmem:[%s614] sm:$0xf]
      %v618 = vunpack.c.l.b16 %v228
      %v619 = vunpack.c.l.b16 %v229
      %v620 = vpack.c.b16 %v618, %v267
      %v621 = vpack.c.b16 %v619, %v619
      %v623 = vshrl.u32 %v620, 16
      %v625 = vrot.slane %v623, 3
      %v626 = vshll.u32 %v620, 16
      %v628 = vrot.slane %v626, 4
      %v629 = vor.u32 %v625, %v628
      %v630 = vsel %vm277, %v347, %v629
      %v632 = vshrl.u32 %v621, 16
      %v634 = vrot.slane %v632, 3
      %v635 = vshll.u32 %v621, 16
      %v637 = vrot.slane %v635, 4
      %v638 = vor.u32 %v634, %v637
      %v639 = vsel %vm277, %v629, %v638
      %v641 = vsel %vm358, %v630, 0
      %v644 = vsel %vm358, %v639, 0
      %v647 = vsel %vm383, %v615, 0
      %649 = vmatprep.subr.bf16.mxu0 0
      %650 = vmatpush1.bf16.msra.mxu0 %v647
      %651 = vmatprep.subr.bf16.mxu0 0
      %652 = vmatpush1.bf16.msra.mxu0 0
      %653 = vmatprep.subr.bf16.mxu0 0
      %654 = vmatpush1.bf16.msra.mxu0 0
      %655 = vmatprep.subr.bf16.mxu0 0
      %656 = vmatpush1.bf16.msra.mxu0 0
      %657 = vmatprep.subr.bf16.mxu0 0
      %658 = vmatpush1.bf16.msra.mxu0 0
      %659 = vmatprep.subr.bf16.mxu0 0
      %660 = vmatpush1.bf16.msra.mxu0 0
      %661 = vmatprep.subr.bf16.mxu0 0
      %662 = vmatpush1.bf16.msra.mxu0 0
      %663 = vmatprep.subr.bf16.mxu0 0
      %664 = vmatpush1.bf16.msra.mxu0 0
      %665 = vmatprep.subr.bf16.mxu0 0
      %666 = vmatpush1.bf16.msra.mxu0 0
      %667 = vmatprep.subr.bf16.mxu0 0
      %668 = vmatpush1.bf16.msra.mxu0 0
      %669 = vmatprep.subr.bf16.mxu0 0
      %670 = vmatpush1.bf16.msra.mxu0 0
      %671 = vmatprep.subr.bf16.mxu0 0
      %672 = vmatpush1.bf16.msra.mxu0 0
      %673 = vmatprep.subr.bf16.mxu0 0
      %674 = vmatpush1.bf16.msra.mxu0 0
      %675 = vmatprep.subr.bf16.mxu0 0
      %676 = vmatpush1.bf16.msra.mxu0 0
      %677 = vmatprep.subr.bf16.mxu0 0
      %678 = vmatpush1.bf16.msra.mxu0 0
      %679 = vmatprep.subr.bf16.mxu0 0
      %680 = vmatpush1.bf16.msra.mxu0 0
      %681 = vmatprep.mubr.bf16.mxu0 0
      %682 = vmatmul.mubr.bf16.gmra.mrb[0].mxu0 %v363
      %v683 = vpop.f32.mrb[0].mxu0
      %v684 = vadd.f32 0.0, %v683
      %v685 = vpop.f32.mrb[0].mxu0
      %v686 = vpop.f32.mrb[0].mxu0
      %v687 = vadd.f32 0.0, %v686
      %v688 = vpop.f32.mrb[0].mxu0
      %689 = vmatprep.mubr.bf16.mxu0 0
      %690 = vmatmul.mubr.bf16.gmra.mrb[0].mxu0 %v366
      %v691 = vpop.f32.mrb[0].mxu0
      %v692 = vadd.f32 0.0, %v691
      %v693 = vpop.f32.mrb[0].mxu0
      %v694 = vpop.f32.mrb[0].mxu0
      %v695 = vadd.f32 0.0, %v694
      %v696 = vpop.f32.mrb[0].mxu0
      %697 = vmatprep.mubr.bf16.mxu0 0
      %698 = vmatmul.mubr.bf16.gmra.mrb[0].mxu0 %v369
      %v699 = vpop.f32.mrb[0].mxu0
      %v700 = vadd.f32 0.0, %v699
      %v701 = vpop.f32.mrb[0].mxu0
      %v702 = vpop.f32.mrb[0].mxu0
      %v703 = vadd.f32 0.0, %v702
      %v704 = vpop.f32.mrb[0].mxu0
      %705 = vmatprep.mubr.bf16.mxu0 0
      %706 = vmatmul.mubr.bf16.gmra.mrb[0].mxu0 %v372
      %v707 = vpop.f32.mrb[0].mxu0
      %v708 = vadd.f32 0.0, %v707
      %v709 = vpop.f32.mrb[0].mxu0
      %v710 = vpop.f32.mrb[0].mxu0
      %v711 = vadd.f32 0.0, %v710
      %v712 = vpop.f32.mrb[0].mxu0
      %713 = vmatprep.mubr.bf16.mxu0 0
      %714 = vmatmul.mubr.bf16.gmra.mrb[0].mxu0 %v375
      %v715 = vpop.f32.mrb[0].mxu0
      %v716 = vadd.f32 0.0, %v715
      %v717 = vpop.f32.mrb[0].mxu0
      %v718 = vpop.f32.mrb[0].mxu0
      %v719 = vadd.f32 0.0, %v718
      %v720 = vpop.f32.mrb[0].mxu0
      %721 = vmatprep.mubr.bf16.mxu0 0
      %722 = vmatmul.mubr.bf16.gmra.mrb[0].mxu0 %v378
      %v723 = vpop.f32.mrb[0].mxu0
      %v724 = vadd.f32 0.0, %v723
      %v725 = vpop.f32.mrb[0].mxu0
      %v726 = vpop.f32.mrb[0].mxu0
      %v727 = vadd.f32 0.0, %v726
      %v728 = vpop.f32.mrb[0].mxu0
      %729 = vmatprep.mubr.bf16.mxu0 0
      %730 = vmatmul.mubr.bf16.gmra.mrb[0].mxu0 %v641
      %v731 = vpop.f32.mrb[0].mxu0
      %v732 = vadd.f32 0.0, %v731
      %v733 = vpop.f32.mrb[0].mxu0
      %v734 = vpop.f32.mrb[0].mxu0
      %v735 = vadd.f32 0.0, %v734
      %v736 = vpop.f32.mrb[0].mxu0
      %737 = vmatprep.mubr.bf16.mxu0 0
      %738 = vmatmul.mubr.bf16.gmra.mrb[0].mxu0 %v644
      %v739 = vpop.f32.mrb[0].mxu0
      %v740 = vadd.f32 0.0, %v739
      %v741 = vpop.f32.mrb[0].mxu0
      %v742 = vpop.f32.mrb[0].mxu0
      %v743 = vadd.f32 0.0, %v742
      %v744 = vpop.f32.mrb[0].mxu0
      %745 = vdwg.mxu0
      %v746 = vadd.f32 %v552, %v684
      %v747 = vadd.f32 %v555, %v687
      %v748 = vadd.f32 %v560, %v692
      %v749 = vadd.f32 %v563, %v695
      %v750 = vadd.f32 %v568, %v700
      %v751 = vadd.f32 %v571, %v703
      %v752 = vadd.f32 %v576, %v708
      %v753 = vadd.f32 %v579, %v711
      %v754 = vadd.f32 %v584, %v716
      %v755 = vadd.f32 %v587, %v719
      %v756 = vadd.f32 %v592, %v724
      %v757 = vadd.f32 %v595, %v727
      %v758 = vadd.f32 %v600, %v732
      %v759 = vadd.f32 %v603, %v735
      %v760 = vadd.f32 %v608, %v740
      %v761 = vadd.f32 %v611, %v743
      %s762 = scalar_lea.vmem %s1, 4
      %v763 = vld [vmem:[%s762] sm:$0xf]
      %v764 = vpack.c.b16 %v251, %v487
      %v765 = vpack.c.b16 %v253, %v252
      %v766 = vpack.c.b16 %v255, %v254
      %v767 = vpack.c.b16 %v257, %v256
      %v768 = vpack.c.b16 %v259, %v258
      %v769 = vpack.c.b16 %v261, %v260
      %v770 = vpack.c.b16 %v263, %v262
      %v771 = vpack.c.b16 %v265, %v264
      %v773 = vsel %vm358, %v764, 0
      %v776 = vsel %vm358, %v765, 0
      %v779 = vsel %vm358, %v766, 0
      %v782 = vsel %vm358, %v767, 0
      %v785 = vsel %vm358, %v768, 0
      %v788 = vsel %vm358, %v769, 0
      %v791 = vsel %vm358, %v770, 0
      %v794 = vsel %vm358, %v771, 0
      %v797 = vsel %vm383, %v763, 0
      %799 = vmatprep.subr.bf16.mxu0 0
      %800 = vmatpush1.bf16.msra.mxu0 %v797
      %801 = vmatprep.subr.bf16.mxu0 0
      %802 = vmatpush1.bf16.msra.mxu0 0
      %803 = vmatprep.subr.bf16.mxu0 0
      %804 = vmatpush1.bf16.msra.mxu0 0
      %805 = vmatprep.subr.bf16.mxu0 0
      %806 = vmatpush1.bf16.msra.mxu0 0
      %807 = vmatprep.subr.bf16.mxu0 0
      %808 = vmatpush1.bf16.msra.mxu0 0
      %809 = vmatprep.subr.bf16.mxu0 0
      %810 = vmatpush1.bf16.msra.mxu0 0
      %811 = vmatprep.subr.bf16.mxu0 0
      %812 = vmatpush1.bf16.msra.mxu0 0
      %813 = vmatprep.subr.bf16.mxu0 0
      %814 = vmatpush1.bf16.msra.mxu0 0
      %815 = vmatprep.subr.bf16.mxu0 0
      %816 = vmatpush1.bf16.msra.mxu0 0
      %817 = vmatprep.subr.bf16.mxu0 0
      %818 = vmatpush1.bf16.msra.mxu0 0
      %819 = vmatprep.subr.bf16.mxu0 0
      %820 = vmatpush1.bf16.msra.mxu0 0
      %821 = vmatprep.subr.bf16.mxu0 0
      %822 = vmatpush1.bf16.msra.mxu0 0
      %823 = vmatprep.subr.bf16.mxu0 0
      %824 = vmatpush1.bf16.msra.mxu0 0
      %825 = vmatprep.subr.bf16.mxu0 0
      %826 = vmatpush1.bf16.msra.mxu0 0
      %827 = vmatprep.subr.bf16.mxu0 0
      %828 = vmatpush1.bf16.msra.mxu0 0
      %829 = vmatprep.subr.bf16.mxu0 0
      %830 = vmatpush1.bf16.msra.mxu0 0
      %831 = vmatprep.mubr.bf16.mxu0 0
      %832 = vmatmul.mubr.bf16.gmra.mrb[0].mxu0 %v773
      %v833 = vpop.f32.mrb[0].mxu0
      %v834 = vadd.f32 0.0, %v833
      %v835 = vpop.f32.mrb[0].mxu0
      %v836 = vpop.f32.mrb[0].mxu0
      %v837 = vadd.f32 0.0, %v836
      %v838 = vpop.f32.mrb[0].mxu0
      %839 = vmatprep.mubr.bf16.mxu0 0
      %840 = vmatmul.mubr.bf16.gmra.mrb[0].mxu0 %v776
      %v841 = vpop.f32.mrb[0].mxu0
      %v842 = vadd.f32 0.0, %v841
      %v843 = vpop.f32.mrb[0].mxu0
      %v844 = vpop.f32.mrb[0].mxu0
      %v845 = vadd.f32 0.0, %v844
      %v846 = vpop.f32.mrb[0].mxu0
      %847 = vmatprep.mubr.bf16.mxu0 0
      %848 = vmatmul.mubr.bf16.gmra.mrb[0].mxu0 %v779
      %v849 = vpop.f32.mrb[0].mxu0
      %v850 = vadd.f32 0.0, %v849
      %v851 = vpop.f32.mrb[0].mxu0
      %v852 = vpop.f32.mrb[0].mxu0
      %v853 = vadd.f32 0.0, %v852
      %v854 = vpop.f32.mrb[0].mxu0
      %855 = vmatprep.mubr.bf16.mxu0 0
      %856 = vmatmul.mubr.bf16.gmra.mrb[0].mxu0 %v782
      %v857 = vpop.f32.mrb[0].mxu0
      %v858 = vadd.f32 0.0, %v857
      %v859 = vpop.f32.mrb[0].mxu0
      %v860 = vpop.f32.mrb[0].mxu0
      %v861 = vadd.f32 0.0, %v860
      %v862 = vpop.f32.mrb[0].mxu0
      %863 = vmatprep.mubr.bf16.mxu0 0
      %864 = vmatmul.mubr.bf16.gmra.mrb[0].mxu0 %v785
      %v865 = vpop.f32.mrb[0].mxu0
      %v866 = vadd.f32 0.0, %v865
      %v867 = vpop.f32.mrb[0].mxu0
      %v868 = vpop.f32.mrb[0].mxu0
      %v869 = vadd.f32 0.0, %v868
      %v870 = vpop.f32.mrb[0].mxu0
      %871 = vmatprep.mubr.bf16.mxu0 0
      %872 = vmatmul.mubr.bf16.gmra.mrb[0].mxu0 %v788
      %v873 = vpop.f32.mrb[0].mxu0
      %v874 = vadd.f32 0.0, %v873
      %v875 = vpop.f32.mrb[0].mxu0
      %v876 = vpop.f32.mrb[0].mxu0
      %v877 = vadd.f32 0.0, %v876
      %v878 = vpop.f32.mrb[0].mxu0
      %879 = vmatprep.mubr.bf16.mxu0 0
      %880 = vmatmul.mubr.bf16.gmra.mrb[0].mxu0 %v791
      %v881 = vpop.f32.mrb[0].mxu0
      %v882 = vadd.f32 0.0, %v881
      %v883 = vpop.f32.mrb[0].mxu0
      %v884 = vpop.f32.mrb[0].mxu0
      %v885 = vadd.f32 0.0, %v884
      %v886 = vpop.f32.mrb[0].mxu0
      %887 = vmatprep.mubr.bf16.mxu0 0
      %888 = vmatmul.mubr.bf16.gmra.mrb[0].mxu0 %v794
      %v889 = vpop.f32.mrb[0].mxu0
      %v890 = vadd.f32 0.0, %v889
      %v891 = vpop.f32.mrb[0].mxu0
      %v892 = vpop.f32.mrb[0].mxu0
      %v893 = vadd.f32 0.0, %v892
      %v894 = vpop.f32.mrb[0].mxu0
      %895 = vdwg.mxu0
      %v896 = vadd.f32 %v746, %v834
      %v897 = vadd.f32 %v747, %v837
      %v898 = vadd.f32 %v748, %v842
      %v899 = vadd.f32 %v749, %v845
      %v900 = vadd.f32 %v750, %v850
      %v901 = vadd.f32 %v751, %v853
      %v902 = vadd.f32 %v752, %v858
      %v903 = vadd.f32 %v753, %v861
      %v904 = vadd.f32 %v754, %v866
      %v905 = vadd.f32 %v755, %v869
      %v906 = vadd.f32 %v756, %v874
      %v907 = vadd.f32 %v757, %v877
      %v908 = vadd.f32 %v758, %v882
      %v909 = vadd.f32 %v759, %v885
      %v910 = vadd.f32 %v760, %v890
      %v911 = vadd.f32 %v761, %v893
      %s912 = scalar_lea.vmem %s1, 16
      %v913 = vld [vmem:[%s912] sm:$0xf]
      %v914 = vpack.c.b16 %v267, %v266
      %v916 = vsel %vm358, %v914, 0
      %v919 = vsel %vm383, %v913, 0
      %921 = vmatprep.subr.bf16.mxu0 0
      %922 = vmatpush1.bf16.msra.mxu0 %v919
      %923 = vmatprep.subr.bf16.mxu0 0
      %924 = vmatpush1.bf16.msra.mxu0 0
      %925 = vmatprep.subr.bf16.mxu0 0
      %926 = vmatpush1.bf16.msra.mxu0 0
      %927 = vmatprep.subr.bf16.mxu0 0
      %928 = vmatpush1.bf16.msra.mxu0 0
      %929 = vmatprep.subr.bf16.mxu0 0
      %930 = vmatpush1.bf16.msra.mxu0 0
      %931 = vmatprep.subr.bf16.mxu0 0
      %932 = vmatpush1.bf16.msra.mxu0 0
      %933 = vmatprep.subr.bf16.mxu0 0
      %934 = vmatpush1.bf16.msra.mxu0 0
      %935 = vmatprep.subr.bf16.mxu0 0
      %936 = vmatpush1.bf16.msra.mxu0 0
      %937 = vmatprep.subr.bf16.mxu0 0
      %938 = vmatpush1.bf16.msra.mxu0 0
      %939 = vmatprep.subr.bf16.mxu0 0
      %940 = vmatpush1.bf16.msra.mxu0 0
      %941 = vmatprep.subr.bf16.mxu0 0
      %942 = vmatpush1.bf16.msra.mxu0 0
      %943 = vmatprep.subr.bf16.mxu0 0
      %944 = vmatpush1.bf16.msra.mxu0 0
      %945 = vmatprep.subr.bf16.mxu0 0
      %946 = vmatpush1.bf16.msra.mxu0 0
      %947 = vmatprep.subr.bf16.mxu0 0
      %948 = vmatpush1.bf16.msra.mxu0 0
      %949 = vmatprep.subr.bf16.mxu0 0
      %950 = vmatpush1.bf16.msra.mxu0 0
      %951 = vmatprep.subr.bf16.mxu0 0
      %952 = vmatpush1.bf16.msra.mxu0 0
      %953 = vmatprep.mubr.bf16.mxu0 0
      %954 = vmatmul.mubr.bf16.gmra.mrb[0].mxu0 %v776
      %v955 = vpop.f32.mrb[0].mxu0
      %v956 = vadd.f32 0.0, %v955
      %v957 = vpop.f32.mrb[0].mxu0
      %v958 = vpop.f32.mrb[0].mxu0
      %v959 = vadd.f32 0.0, %v958
      %v960 = vpop.f32.mrb[0].mxu0
      %961 = vmatprep.mubr.bf16.mxu0 0
      %962 = vmatmul.mubr.bf16.gmra.mrb[0].mxu0 %v779
      %v963 = vpop.f32.mrb[0].mxu0
      %v964 = vadd.f32 0.0, %v963
      %v965 = vpop.f32.mrb[0].mxu0
      %v966 = vpop.f32.mrb[0].mxu0
      %v967 = vadd.f32 0.0, %v966
      %v968 = vpop.f32.mrb[0].mxu0
      %969 = vmatprep.mubr.bf16.mxu0 0
      %970 = vmatmul.mubr.bf16.gmra.mrb[0].mxu0 %v782
      %v971 = vpop.f32.mrb[0].mxu0
      %v972 = vadd.f32 0.0, %v971
      %v973 = vpop.f32.mrb[0].mxu0
      %v974 = vpop.f32.mrb[0].mxu0
      %v975 = vadd.f32 0.0, %v974
      %v976 = vpop.f32.mrb[0].mxu0
      %977 = vmatprep.mubr.bf16.mxu0 0
      %978 = vmatmul.mubr.bf16.gmra.mrb[0].mxu0 %v785
      %v979 = vpop.f32.mrb[0].mxu0
      %v980 = vadd.f32 0.0, %v979
      %v981 = vpop.f32.mrb[0].mxu0
      %v982 = vpop.f32.mrb[0].mxu0
      %v983 = vadd.f32 0.0, %v982
      %v984 = vpop.f32.mrb[0].mxu0
      %985 = vmatprep.mubr.bf16.mxu0 0
      %986 = vmatmul.mubr.bf16.gmra.mrb[0].mxu0 %v788
      %v987 = vpop.f32.mrb[0].mxu0
      %v988 = vadd.f32 0.0, %v987
      %v989 = vpop.f32.mrb[0].mxu0
      %v990 = vpop.f32.mrb[0].mxu0
      %v991 = vadd.f32 0.0, %v990
      %v992 = vpop.f32.mrb[0].mxu0
      %993 = vmatprep.mubr.bf16.mxu0 0
      %994 = vmatmul.mubr.bf16.gmra.mrb[0].mxu0 %v791
      %v995 = vpop.f32.mrb[0].mxu0
      %v996 = vadd.f32 0.0, %v995
      %v997 = vpop.f32.mrb[0].mxu0
      %v998 = vpop.f32.mrb[0].mxu0
      %v999 = vadd.f32 0.0, %v998
      %v1000 = vpop.f32.mrb[0].mxu0
      %1001 = vmatprep.mubr.bf16.mxu0 0
      %1002 = vmatmul.mubr.bf16.gmra.mrb[0].mxu0 %v794
      %v1003 = vpop.f32.mrb[0].mxu0
      %v1004 = vadd.f32 0.0, %v1003
      %v1005 = vpop.f32.mrb[0].mxu0
      %v1006 = vpop.f32.mrb[0].mxu0
      %v1007 = vadd.f32 0.0, %v1006
      %v1008 = vpop.f32.mrb[0].mxu0
      %1009 = vmatprep.mubr.bf16.mxu0 0
      %1010 = vmatmul.mubr.bf16.gmra.mrb[0].mxu0 %v916
      %v1011 = vpop.f32.mrb[0].mxu0
      %v1012 = vadd.f32 0.0, %v1011
      %v1013 = vpop.f32.mrb[0].mxu0
      %v1014 = vpop.f32.mrb[0].mxu0
      %v1015 = vadd.f32 0.0, %v1014
      %v1016 = vpop.f32.mrb[0].mxu0
      %1017 = vdwg.mxu0
      %v1018 = vadd.f32 %v896, %v956
      %v1019 = vadd.f32 %v897, %v959
      %v1020 = vadd.f32 %v898, %v964
      %v1021 = vadd.f32 %v899, %v967
      %v1022 = vadd.f32 %v900, %v972
      %v1023 = vadd.f32 %v901, %v975
      %v1024 = vadd.f32 %v902, %v980
      %v1025 = vadd.f32 %v903, %v983
      %v1026 = vadd.f32 %v904, %v988
      %v1027 = vadd.f32 %v905, %v991
      %v1028 = vadd.f32 %v906, %v996
      %v1029 = vadd.f32 %v907, %v999
      %v1030 = vadd.f32 %v908, %v1004
      %v1031 = vadd.f32 %v909, %v1007
      %v1032 = vadd.f32 %v910, %v1012
      %v1033 = vadd.f32 %v911, %v1015
      %s1034 = scalar_lea.vmem %s1, 28
      %v1035 = vld [vmem:[%s1034] sm:$0xf]
      %v1036 = vpack.c.b16 %v619, %v618
      %v1038 = vsel %vm358, %v1036, 0
      %v1041 = vsel %vm383, %v1035, 0
      %1043 = vmatprep.subr.bf16.mxu0 0
      %1044 = vmatpush1.bf16.msra.mxu0 %v1041
      %1045 = vmatprep.subr.bf16.mxu0 0
      %1046 = vmatpush1.bf16.msra.mxu0 0
      %1047 = vmatprep.subr.bf16.mxu0 0
      %1048 = vmatpush1.bf16.msra.mxu0 0
      %1049 = vmatprep.subr.bf16.mxu0 0
      %1050 = vmatpush1.bf16.msra.mxu0 0
      %1051 = vmatprep.subr.bf16.mxu0 0
      %1052 = vmatpush1.bf16.msra.mxu0 0
      %1053 = vmatprep.subr.bf16.mxu0 0
      %1054 = vmatpush1.bf16.msra.mxu0 0
      %1055 = vmatprep.subr.bf16.mxu0 0
      %1056 = vmatpush1.bf16.msra.mxu0 0
      %1057 = vmatprep.subr.bf16.mxu0 0
      %1058 = vmatpush1.bf16.msra.mxu0 0
      %1059 = vmatprep.subr.bf16.mxu0 0
      %1060 = vmatpush1.bf16.msra.mxu0 0
      %1061 = vmatprep.subr.bf16.mxu0 0
      %1062 = vmatpush1.bf16.msra.mxu0 0
      %1063 = vmatprep.subr.bf16.mxu0 0
      %1064 = vmatpush1.bf16.msra.mxu0 0
      %1065 = vmatprep.subr.bf16.mxu0 0
      %1066 = vmatpush1.bf16.msra.mxu0 0
      %1067 = vmatprep.subr.bf16.mxu0 0
      %1068 = vmatpush1.bf16.msra.mxu0 0
      %1069 = vmatprep.subr.bf16.mxu0 0
      %1070 = vmatpush1.bf16.msra.mxu0 0
      %1071 = vmatprep.subr.bf16.mxu0 0
      %1072 = vmatpush1.bf16.msra.mxu0 0
      %1073 = vmatprep.subr.bf16.mxu0 0
      %1074 = vmatpush1.bf16.msra.mxu0 0
      %1075 = vmatprep.mubr.bf16.mxu0 0
      %1076 = vmatmul.mubr.bf16.gmra.mrb[0].mxu0 %v779
      %v1077 = vpop.f32.mrb[0].mxu0
      %v1078 = vadd.f32 0.0, %v1077
      %v1079 = vpop.f32.mrb[0].mxu0
      %v1080 = vpop.f32.mrb[0].mxu0
      %v1081 = vadd.f32 0.0, %v1080
      %v1082 = vpop.f32.mrb[0].mxu0
      %1083 = vmatprep.mubr.bf16.mxu0 0
      %1084 = vmatmul.mubr.bf16.gmra.mrb[0].mxu0 %v782
      %v1085 = vpop.f32.mrb[0].mxu0
      %v1086 = vadd.f32 0.0, %v1085
      %v1087 = vpop.f32.mrb[0].mxu0
      %v1088 = vpop.f32.mrb[0].mxu0
      %v1089 = vadd.f32 0.0, %v1088
      %v1090 = vpop.f32.mrb[0].mxu0
      %1091 = vmatprep.mubr.bf16.mxu0 0
      %1092 = vmatmul.mubr.bf16.gmra.mrb[0].mxu0 %v785
      %v1093 = vpop.f32.mrb[0].mxu0
      %v1094 = vadd.f32 0.0, %v1093
      %v1095 = vpop.f32.mrb[0].mxu0
      %v1096 = vpop.f32.mrb[0].mxu0
      %v1097 = vadd.f32 0.0, %v1096
      %v1098 = vpop.f32.mrb[0].mxu0
      %1099 = vmatprep.mubr.bf16.mxu0 0
      %1100 = vmatmul.mubr.bf16.gmra.mrb[0].mxu0 %v788
      %v1101 = vpop.f32.mrb[0].mxu0
      %v1102 = vadd.f32 0.0, %v1101
      %v1103 = vpop.f32.mrb[0].mxu0
      %v1104 = vpop.f32.mrb[0].mxu0
      %v1105 = vadd.f32 0.0, %v1104
      %v1106 = vpop.f32.mrb[0].mxu0
      %1107 = vmatprep.mubr.bf16.mxu0 0
      %1108 = vmatmul.mubr.bf16.gmra.mrb[0].mxu0 %v791
      %v1109 = vpop.f32.mrb[0].mxu0
      %v1110 = vadd.f32 0.0, %v1109
      %v1111 = vpop.f32.mrb[0].mxu0
      %v1112 = vpop.f32.mrb[0].mxu0
      %v1113 = vadd.f32 0.0, %v1112
      %v1114 = vpop.f32.mrb[0].mxu0
      %1115 = vmatprep.mubr.bf16.mxu0 0
      %1116 = vmatmul.mubr.bf16.gmra.mrb[0].mxu0 %v794
      %v1117 = vpop.f32.mrb[0].mxu0
      %v1118 = vadd.f32 0.0, %v1117
      %v1119 = vpop.f32.mrb[0].mxu0
      %v1120 = vpop.f32.mrb[0].mxu0
      %v1121 = vadd.f32 0.0, %v1120
      %v1122 = vpop.f32.mrb[0].mxu0
      %1123 = vmatprep.mubr.bf16.mxu0 0
      %1124 = vmatmul.mubr.bf16.gmra.mrb[0].mxu0 %v916
      %v1125 = vpop.f32.mrb[0].mxu0
      %v1126 = vadd.f32 0.0, %v1125
      %v1127 = vpop.f32.mrb[0].mxu0
      %v1128 = vpop.f32.mrb[0].mxu0
      %v1129 = vadd.f32 0.0, %v1128
      %v1130 = vpop.f32.mrb[0].mxu0
      %1131 = vmatprep.mubr.bf16.mxu0 0
      %1132 = vmatmul.mubr.bf16.gmra.mrb[0].mxu0 %v1038
      %v1133 = vpop.f32.mrb[0].mxu0
      %v1134 = vadd.f32 0.0, %v1133
      %v1135 = vpop.f32.mrb[0].mxu0
      %v1136 = vpop.f32.mrb[0].mxu0
      %v1137 = vadd.f32 0.0, %v1136
      %v1138 = vpop.f32.mrb[0].mxu0
      %1139 = vdwg.mxu0
      %v1140 = vadd.f32 %v1018, %v1078
      %v1141 = vadd.f32 %v1019, %v1081
      %v1142 = vadd.f32 %v1020, %v1086
      %v1143 = vadd.f32 %v1021, %v1089
      %v1144 = vadd.f32 %v1022, %v1094
      %v1145 = vadd.f32 %v1023, %v1097
      %v1146 = vadd.f32 %v1024, %v1102
      %v1147 = vadd.f32 %v1025, %v1105
      %v1148 = vadd.f32 %v1026, %v1110
      %v1149 = vadd.f32 %v1027, %v1113
      %v1150 = vadd.f32 %v1028, %v1118
      %v1151 = vadd.f32 %v1029, %v1121
      %v1152 = vadd.f32 %v1030, %v1126
      %v1153 = vadd.f32 %v1031, %v1129
      %v1154 = vadd.f32 %v1032, %v1134
      %v1155 = vadd.f32 %v1033, %v1137
      %s1156 = scalar_lea.vmem %s1, 8
      %v1157 = vld [vmem:[%s1156] sm:$0xf]
      %v1158 = vpack.c.b16 %v266, %v266
      %vm1159 = vsmask.f32 7424
      %v1160 = vshrl.u32 %v764, 16
      %v1162 = vshll.u32 %v764, 16
      %v1164 = vrot.slane %v1162, 1
      %v1165 = vor.u32 %v1160, %v1164
      %v1166 = vshll.u32 %v765, 16
      %v1168 = vrot.slane %v1166, 1
      %v1169 = vsel %vm1159, %v1165, %v1168
      %v1170 = vshrl.u32 %v765, 16
      %v1172 = vor.u32 %v1170, %v1168
      %v1173 = vshll.u32 %v766, 16
      %v1175 = vrot.slane %v1173, 1
      %v1176 = vsel %vm1159, %v1172, %v1175
      %v1177 = vshrl.u32 %v766, 16
      %v1179 = vor.u32 %v1177, %v1175
      %v1180 = vshll.u32 %v767, 16
      %v1182 = vrot.slane %v1180, 1
      %v1183 = vsel %vm1159, %v1179, %v1182
      %v1184 = vshrl.u32 %v767, 16
      %v1186 = vor.u32 %v1184, %v1182
      %v1187 = vshll.u32 %v768, 16
      %v1189 = vrot.slane %v1187, 1
      %v1190 = vsel %vm1159, %v1186, %v1189
      %v1191 = vshrl.u32 %v768, 16
      %v1193 = vor.u32 %v1191, %v1189
      %v1194 = vshll.u32 %v769, 16
      %v1196 = vrot.slane %v1194, 1
      %v1197 = vsel %vm1159, %v1193, %v1196
      %v1198 = vshrl.u32 %v769, 16
      %v1200 = vor.u32 %v1198, %v1196
      %v1201 = vshll.u32 %v770, 16
      %v1203 = vrot.slane %v1201, 1
      %v1204 = vsel %vm1159, %v1200, %v1203
      %v1205 = vshrl.u32 %v770, 16
      %v1207 = vor.u32 %v1205, %v1203
      %v1208 = vshll.u32 %v771, 16
      %v1210 = vrot.slane %v1208, 1
      %v1211 = vsel %vm1159, %v1207, %v1210
      %v1212 = vshrl.u32 %v771, 16
      %v1214 = vor.u32 %v1212, %v1210
      %v1216 = vshll.u32 %v1158, 16
      %v1218 = vrot.slane %v1216, 1
      %v1219 = vsel %vm1159, %v1214, %v1218
      %v1221 = vsel %vm358, %v1169, 0
      %v1224 = vsel %vm358, %v1176, 0
      %v1227 = vsel %vm358, %v1183, 0
      %v1230 = vsel %vm358, %v1190, 0
      %v1233 = vsel %vm358, %v1197, 0
      %v1236 = vsel %vm358, %v1204, 0
      %v1239 = vsel %vm358, %v1211, 0
      %v1242 = vsel %vm358, %v1219, 0
      %v1245 = vsel %vm383, %v1157, 0
      %1247 = vmatprep.subr.bf16.mxu0 0
      %1248 = vmatpush1.bf16.msra.mxu0 %v1245
      %1249 = vmatprep.subr.bf16.mxu0 0
      %1250 = vmatpush1.bf16.msra.mxu0 0
      %1251 = vmatprep.subr.bf16.mxu0 0
      %1252 = vmatpush1.bf16.msra.mxu0 0
      %1253 = vmatprep.subr.bf16.mxu0 0
      %1254 = vmatpush1.bf16.msra.mxu0 0
      %1255 = vmatprep.subr.bf16.mxu0 0
      %1256 = vmatpush1.bf16.msra.mxu0 0
      %1257 = vmatprep.subr.bf16.mxu0 0
      %1258 = vmatpush1.bf16.msra.mxu0 0
      %1259 = vmatprep.subr.bf16.mxu0 0
      %1260 = vmatpush1.bf16.msra.mxu0 0
      %1261 = vmatprep.subr.bf16.mxu0 0
      %1262 = vmatpush1.bf16.msra.mxu0 0
      %1263 = vmatprep.subr.bf16.mxu0 0
      %1264 = vmatpush1.bf16.msra.mxu0 0
      %1265 = vmatprep.subr.bf16.mxu0 0
      %1266 = vmatpush1.bf16.msra.mxu0 0
      %1267 = vmatprep.subr.bf16.mxu0 0
      %1268 = vmatpush1.bf16.msra.mxu0 0
      %1269 = vmatprep.subr.bf16.mxu0 0
      %1270 = vmatpush1.bf16.msra.mxu0 0
      %1271 = vmatprep.subr.bf16.mxu0 0
      %1272 = vmatpush1.bf16.msra.mxu0 0
      %1273 = vmatprep.subr.bf16.mxu0 0
      %1274 = vmatpush1.bf16.msra.mxu0 0
      %1275 = vmatprep.subr.bf16.mxu0 0
      %1276 = vmatpush1.bf16.msra.mxu0 0
      %1277 = vmatprep.subr.bf16.mxu0 0
      %1278 = vmatpush1.bf16.msra.mxu0 0
      %1279 = vmatprep.mubr.bf16.mxu0 0
      %1280 = vmatmul.mubr.bf16.gmra.mrb[0].mxu0 %v1221
      %v1281 = vpop.f32.mrb[0].mxu0
      %v1282 = vadd.f32 0.0, %v1281
      %v1283 = vpop.f32.mrb[0].mxu0
      %v1284 = vpop.f32.mrb[0].mxu0
      %v1285 = vadd.f32 0.0, %v1284
      %v1286 = vpop.f32.mrb[0].mxu0
      %1287 = vmatprep.mubr.bf16.mxu0 0
      %1288 = vmatmul.mubr.bf16.gmra.mrb[0].mxu0 %v1224
      %v1289 = vpop.f32.mrb[0].mxu0
      %v1290 = vadd.f32 0.0, %v1289
      %v1291 = vpop.f32.mrb[0].mxu0
      %v1292 = vpop.f32.mrb[0].mxu0
      %v1293 = vadd.f32 0.0, %v1292
      %v1294 = vpop.f32.mrb[0].mxu0
      %1295 = vmatprep.mubr.bf16.mxu0 0
      %1296 = vmatmul.mubr.bf16.gmra.mrb[0].mxu0 %v1227
      %v1297 = vpop.f32.mrb[0].mxu0
      %v1298 = vadd.f32 0.0, %v1297
      %v1299 = vpop.f32.mrb[0].mxu0
      %v1300 = vpop.f32.mrb[0].mxu0
      %v1301 = vadd.f32 0.0, %v1300
      %v1302 = vpop.f32.mrb[0].mxu0
      %1303 = vmatprep.mubr.bf16.mxu0 0
      %1304 = vmatmul.mubr.bf16.gmra.mrb[0].mxu0 %v1230
      %v1305 = vpop.f32.mrb[0].mxu0
      %v1306 = vadd.f32 0.0, %v1305
      %v1307 = vpop.f32.mrb[0].mxu0
      %v1308 = vpop.f32.mrb[0].mxu0
      %v1309 = vadd.f32 0.0, %v1308
      %v1310 = vpop.f32.mrb[0].mxu0
      %1311 = vmatprep.mubr.bf16.mxu0 0
      %1312 = vmatmul.mubr.bf16.gmra.mrb[0].mxu0 %v1233
      %v1313 = vpop.f32.mrb[0].mxu0
      %v1314 = vadd.f32 0.0, %v1313
      %v1315 = vpop.f32.mrb[0].mxu0
      %v1316 = vpop.f32.mrb[0].mxu0
      %v1317 = vadd.f32 0.0, %v1316
      %v1318 = vpop.f32.mrb[0].mxu0
      %1319 = vmatprep.mubr.bf16.mxu0 0
      %1320 = vmatmul.mubr.bf16.gmra.mrb[0].mxu0 %v1236
      %v1321 = vpop.f32.mrb[0].mxu0
      %v1322 = vadd.f32 0.0, %v1321
      %v1323 = vpop.f32.mrb[0].mxu0
      %v1324 = vpop.f32.mrb[0].mxu0
      %v1325 = vadd.f32 0.0, %v1324
      %v1326 = vpop.f32.mrb[0].mxu0
      %1327 = vmatprep.mubr.bf16.mxu0 0
      %1328 = vmatmul.mubr.bf16.gmra.mrb[0].mxu0 %v1239
      %v1329 = vpop.f32.mrb[0].mxu0
      %v1330 = vadd.f32 0.0, %v1329
      %v1331 = vpop.f32.mrb[0].mxu0
      %v1332 = vpop.f32.mrb[0].mxu0
      %v1333 = vadd.f32 0.0, %v1332
      %v1334 = vpop.f32.mrb[0].mxu0
      %1335 = vmatprep.mubr.bf16.mxu0 0
      %1336 = vmatmul.mubr.bf16.gmra.mrb[0].mxu0 %v1242
      %v1337 = vpop.f32.mrb[0].mxu0
      %v1338 = vadd.f32 0.0, %v1337
      %v1339 = vpop.f32.mrb[0].mxu0
      %v1340 = vpop.f32.mrb[0].mxu0
      %v1341 = vadd.f32 0.0, %v1340
      %v1342 = vpop.f32.mrb[0].mxu0
      %1343 = vdwg.mxu0
      %v1344 = vadd.f32 %v1140, %v1282
      %v1345 = vadd.f32 %v1141, %v1285
      %v1346 = vadd.f32 %v1142, %v1290
      %v1347 = vadd.f32 %v1143, %v1293
      %v1348 = vadd.f32 %v1144, %v1298
      %v1349 = vadd.f32 %v1145, %v1301
      %v1350 = vadd.f32 %v1146, %v1306
      %v1351 = vadd.f32 %v1147, %v1309
      %v1352 = vadd.f32 %v1148, %v1314
      %v1353 = vadd.f32 %v1149, %v1317
      %v1354 = vadd.f32 %v1150, %v1322
      %v1355 = vadd.f32 %v1151, %v1325
      %v1356 = vadd.f32 %v1152, %v1330
      %v1357 = vadd.f32 %v1153, %v1333
      %v1358 = vadd.f32 %v1154, %v1338
      %v1359 = vadd.f32 %v1155, %v1341
      %s1360 = scalar_lea.vmem %s1, 20
      %v1361 = vld [vmem:[%s1360] sm:$0xf]
      %v1362 = vpack.c.b16 %v618, %v618
      %v1363 = vshll.u32 %v914, 16
      %v1365 = vrot.slane %v1363, 1
      %v1366 = vsel %vm1159, %v1214, %v1365
      %v1367 = vshrl.u32 %v914, 16
      %v1369 = vor.u32 %v1367, %v1365
      %v1371 = vshll.u32 %v1362, 16
      %v1373 = vrot.slane %v1371, 1
      %v1374 = vsel %vm1159, %v1369, %v1373
      %v1376 = vsel %vm358, %v1366, 0
      %v1379 = vsel %vm358, %v1374, 0
      %v1382 = vsel %vm383, %v1361, 0
      %1384 = vmatprep.subr.bf16.mxu0 0
      %1385 = vmatpush1.bf16.msra.mxu0 %v1382
      %1386 = vmatprep.subr.bf16.mxu0 0
      %1387 = vmatpush1.bf16.msra.mxu0 0
      %1388 = vmatprep.subr.bf16.mxu0 0
      %1389 = vmatpush1.bf16.msra.mxu0 0
      %1390 = vmatprep.subr.bf16.mxu0 0
      %1391 = vmatpush1.bf16.msra.mxu0 0
      %1392 = vmatprep.subr.bf16.mxu0 0
      %1393 = vmatpush1.bf16.msra.mxu0 0
      %1394 = vmatprep.subr.bf16.mxu0 0
      %1395 = vmatpush1.bf16.msra.mxu0 0
      %1396 = vmatprep.subr.bf16.mxu0 0
      %1397 = vmatpush1.bf16.msra.mxu0 0
      %1398 = vmatprep.subr.bf16.mxu0 0
      %1399 = vmatpush1.bf16.msra.mxu0 0
      %1400 = vmatprep.subr.bf16.mxu0 0
      %1401 = vmatpush1.bf16.msra.mxu0 0
      %1402 = vmatprep.subr.bf16.mxu0 0
      %1403 = vmatpush1.bf16.msra.mxu0 0
      %1404 = vmatprep.subr.bf16.mxu0 0
      %1405 = vmatpush1.bf16.msra.mxu0 0
      %1406 = vmatprep.subr.bf16.mxu0 0
      %1407 = vmatpush1.bf16.msra.mxu0 0
      %1408 = vmatprep.subr.bf16.mxu0 0
      %1409 = vmatpush1.bf16.msra.mxu0 0
      %1410 = vmatprep.subr.bf16.mxu0 0
      %1411 = vmatpush1.bf16.msra.mxu0 0
      %1412 = vmatprep.subr.bf16.mxu0 0
      %1413 = vmatpush1.bf16.msra.mxu0 0
      %1414 = vmatprep.subr.bf16.mxu0 0
      %1415 = vmatpush1.bf16.msra.mxu0 0
      %1416 = vmatprep.mubr.bf16.mxu0 0
      %1417 = vmatmul.mubr.bf16.gmra.mrb[0].mxu0 %v1224
      %v1418 = vpop.f32.mrb[0].mxu0
      %v1419 = vadd.f32 0.0, %v1418
      %v1420 = vpop.f32.mrb[0].mxu0
      %v1421 = vpop.f32.mrb[0].mxu0
      %v1422 = vadd.f32 0.0, %v1421
      %v1423 = vpop.f32.mrb[0].mxu0
      %1424 = vmatprep.mubr.bf16.mxu0 0
      %1425 = vmatmul.mubr.bf16.gmra.mrb[0].mxu0 %v1227
      %v1426 = vpop.f32.mrb[0].mxu0
      %v1427 = vadd.f32 0.0, %v1426
      %v1428 = vpop.f32.mrb[0].mxu0
      %v1429 = vpop.f32.mrb[0].mxu0
      %v1430 = vadd.f32 0.0, %v1429
      %v1431 = vpop.f32.mrb[0].mxu0
      %1432 = vmatprep.mubr.bf16.mxu0 0
      %1433 = vmatmul.mubr.bf16.gmra.mrb[0].mxu0 %v1230
      %v1434 = vpop.f32.mrb[0].mxu0
      %v1435 = vadd.f32 0.0, %v1434
      %v1436 = vpop.f32.mrb[0].mxu0
      %v1437 = vpop.f32.mrb[0].mxu0
      %v1438 = vadd.f32 0.0, %v1437
      %v1439 = vpop.f32.mrb[0].mxu0
      %1440 = vmatprep.mubr.bf16.mxu0 0
      %1441 = vmatmul.mubr.bf16.gmra.mrb[0].mxu0 %v1233
      %v1442 = vpop.f32.mrb[0].mxu0
      %v1443 = vadd.f32 0.0, %v1442
      %v1444 = vpop.f32.mrb[0].mxu0
      %v1445 = vpop.f32.mrb[0].mxu0
      %v1446 = vadd.f32 0.0, %v1445
      %v1447 = vpop.f32.mrb[0].mxu0
      %1448 = vmatprep.mubr.bf16.mxu0 0
      %1449 = vmatmul.mubr.bf16.gmra.mrb[0].mxu0 %v1236
      %v1450 = vpop.f32.mrb[0].mxu0
      %v1451 = vadd.f32 0.0, %v1450
      %v1452 = vpop.f32.mrb[0].mxu0
      %v1453 = vpop.f32.mrb[0].mxu0
      %v1454 = vadd.f32 0.0, %v1453
      %v1455 = vpop.f32.mrb[0].mxu0
      %1456 = vmatprep.mubr.bf16.mxu0 0
      %1457 = vmatmul.mubr.bf16.gmra.mrb[0].mxu0 %v1239
      %v1458 = vpop.f32.mrb[0].mxu0
      %v1459 = vadd.f32 0.0, %v1458
      %v1460 = vpop.f32.mrb[0].mxu0
      %v1461 = vpop.f32.mrb[0].mxu0
      %v1462 = vadd.f32 0.0, %v1461
      %v1463 = vpop.f32.mrb[0].mxu0
      %1464 = vmatprep.mubr.bf16.mxu0 0
      %1465 = vmatmul.mubr.bf16.gmra.mrb[0].mxu0 %v1376
      %v1466 = vpop.f32.mrb[0].mxu0
      %v1467 = vadd.f32 0.0, %v1466
      %v1468 = vpop.f32.mrb[0].mxu0
      %v1469 = vpop.f32.mrb[0].mxu0
      %v1470 = vadd.f32 0.0, %v1469
      %v1471 = vpop.f32.mrb[0].mxu0
      %1472 = vmatprep.mubr.bf16.mxu0 0
      %1473 = vmatmul.mubr.bf16.gmra.mrb[0].mxu0 %v1379
      %v1474 = vpop.f32.mrb[0].mxu0
      %v1475 = vadd.f32 0.0, %v1474
      %v1476 = vpop.f32.mrb[0].mxu0
      %v1477 = vpop.f32.mrb[0].mxu0
      %v1478 = vadd.f32 0.0, %v1477
      %v1479 = vpop.f32.mrb[0].mxu0
      %1480 = vdwg.mxu0
      %v1481 = vadd.f32 %v1344, %v1419
      %v1482 = vadd.f32 %v1345, %v1422
      %v1483 = vadd.f32 %v1346, %v1427
      %v1484 = vadd.f32 %v1347, %v1430
      %v1485 = vadd.f32 %v1348, %v1435
      %v1486 = vadd.f32 %v1349, %v1438
      %v1487 = vadd.f32 %v1350, %v1443
      %v1488 = vadd.f32 %v1351, %v1446
      %v1489 = vadd.f32 %v1352, %v1451
      %v1490 = vadd.f32 %v1353, %v1454
      %v1491 = vadd.f32 %v1354, %v1459
      %v1492 = vadd.f32 %v1355, %v1462
      %v1493 = vadd.f32 %v1356, %v1467
      %v1494 = vadd.f32 %v1357, %v1470
      %v1495 = vadd.f32 %v1358, %v1475
      %v1496 = vadd.f32 %v1359, %v1478
      %s1497 = scalar_lea.vmem %s1, 32
      %v1498 = vld [vmem:[%s1497] sm:$0xf]
      %v1500 = vunpack.c.l.b16 %v230
      %v1501 = vpack.c.b16 %v1500, %v1500
      %v1502 = vshll.u32 %v1036, 16
      %v1504 = vrot.slane %v1502, 1
      %v1505 = vsel %vm1159, %v1369, %v1504
      %v1506 = vshrl.u32 %v1036, 16
      %v1508 = vor.u32 %v1506, %v1504
      %v1510 = vshll.u32 %v1501, 16
      %v1512 = vrot.slane %v1510, 1
      %v1513 = vsel %vm1159, %v1508, %v1512
      %v1515 = vsel %vm358, %v1505, 0
      %v1518 = vsel %vm358, %v1513, 0
      %v1521 = vsel %vm383, %v1498, 0
      %1523 = vmatprep.subr.bf16.mxu0 0
      %1524 = vmatpush1.bf16.msra.mxu0 %v1521
      %1525 = vmatprep.subr.bf16.mxu0 0
      %1526 = vmatpush1.bf16.msra.mxu0 0
      %1527 = vmatprep.subr.bf16.mxu0 0
      %1528 = vmatpush1.bf16.msra.mxu0 0
      %1529 = vmatprep.subr.bf16.mxu0 0
      %1530 = vmatpush1.bf16.msra.mxu0 0
      %1531 = vmatprep.subr.bf16.mxu0 0
      %1532 = vmatpush1.bf16.msra.mxu0 0
      %1533 = vmatprep.subr.bf16.mxu0 0
      %1534 = vmatpush1.bf16.msra.mxu0 0
      %1535 = vmatprep.subr.bf16.mxu0 0
      %1536 = vmatpush1.bf16.msra.mxu0 0
      %1537 = vmatprep.subr.bf16.mxu0 0
      %1538 = vmatpush1.bf16.msra.mxu0 0
      %1539 = vmatprep.subr.bf16.mxu0 0
      %1540 = vmatpush1.bf16.msra.mxu0 0
      %1541 = vmatprep.subr.bf16.mxu0 0
      %1542 = vmatpush1.bf16.msra.mxu0 0
      %1543 = vmatprep.subr.bf16.mxu0 0
      %1544 = vmatpush1.bf16.msra.mxu0 0
      %1545 = vmatprep.subr.bf16.mxu0 0
      %1546 = vmatpush1.bf16.msra.mxu0 0
      %1547 = vmatprep.subr.bf16.mxu0 0
      %1548 = vmatpush1.bf16.msra.mxu0 0
      %1549 = vmatprep.subr.bf16.mxu0 0
      %1550 = vmatpush1.bf16.msra.mxu0 0
      %1551 = vmatprep.subr.bf16.mxu0 0
      %1552 = vmatpush1.bf16.msra.mxu0 0
      %1553 = vmatprep.subr.bf16.mxu0 0
      %1554 = vmatpush1.bf16.msra.mxu0 0
      %1555 = vmatprep.mubr.bf16.mxu0 0
      %1556 = vmatmul.mubr.bf16.gmra.mrb[0].mxu0 %v1227
      %v1557 = vpop.f32.mrb[0].mxu0
      %v1558 = vadd.f32 0.0, %v1557
      %v1559 = vpop.f32.mrb[0].mxu0
      %v1560 = vpop.f32.mrb[0].mxu0
      %v1561 = vadd.f32 0.0, %v1560
      %v1562 = vpop.f32.mrb[0].mxu0
      %1563 = vmatprep.mubr.bf16.mxu0 0
      %1564 = vmatmul.mubr.bf16.gmra.mrb[0].mxu0 %v1230
      %v1565 = vpop.f32.mrb[0].mxu0
      %v1566 = vadd.f32 0.0, %v1565
      %v1567 = vpop.f32.mrb[0].mxu0
      %v1568 = vpop.f32.mrb[0].mxu0
      %v1569 = vadd.f32 0.0, %v1568
      %v1570 = vpop.f32.mrb[0].mxu0
      %1571 = vmatprep.mubr.bf16.mxu0 0
      %1572 = vmatmul.mubr.bf16.gmra.mrb[0].mxu0 %v1233
      %v1573 = vpop.f32.mrb[0].mxu0
      %v1574 = vadd.f32 0.0, %v1573
      %v1575 = vpop.f32.mrb[0].mxu0
      %v1576 = vpop.f32.mrb[0].mxu0
      %v1577 = vadd.f32 0.0, %v1576
      %v1578 = vpop.f32.mrb[0].mxu0
      %1579 = vmatprep.mubr.bf16.mxu0 0
      %1580 = vmatmul.mubr.bf16.gmra.mrb[0].mxu0 %v1236
      %v1581 = vpop.f32.mrb[0].mxu0
      %v1582 = vadd.f32 0.0, %v1581
      %v1583 = vpop.f32.mrb[0].mxu0
      %v1584 = vpop.f32.mrb[0].mxu0
      %v1585 = vadd.f32 0.0, %v1584
      %v1586 = vpop.f32.mrb[0].mxu0
      %1587 = vmatprep.mubr.bf16.mxu0 0
      %1588 = vmatmul.mubr.bf16.gmra.mrb[0].mxu0 %v1239
      %v1589 = vpop.f32.mrb[0].mxu0
      %v1590 = vadd.f32 0.0, %v1589
      %v1591 = vpop.f32.mrb[0].mxu0
      %v1592 = vpop.f32.mrb[0].mxu0
      %v1593 = vadd.f32 0.0, %v1592
      %v1594 = vpop.f32.mrb[0].mxu0
      %1595 = vmatprep.mubr.bf16.mxu0 0
      %1596 = vmatmul.mubr.bf16.gmra.mrb[0].mxu0 %v1376
      %v1597 = vpop.f32.mrb[0].mxu0
      %v1598 = vadd.f32 0.0, %v1597
      %v1599 = vpop.f32.mrb[0].mxu0
      %v1600 = vpop.f32.mrb[0].mxu0
      %v1601 = vadd.f32 0.0, %v1600
      %v1602 = vpop.f32.mrb[0].mxu0
      %1603 = vmatprep.mubr.bf16.mxu0 0
      %1604 = vmatmul.mubr.bf16.gmra.mrb[0].mxu0 %v1515
      %v1605 = vpop.f32.mrb[0].mxu0
      %v1606 = vadd.f32 0.0, %v1605
      %v1607 = vpop.f32.mrb[0].mxu0
      %v1608 = vpop.f32.mrb[0].mxu0
      %v1609 = vadd.f32 0.0, %v1608
      %v1610 = vpop.f32.mrb[0].mxu0
      %1611 = vmatprep.mubr.bf16.mxu0 0
      %1612 = vmatmul.mubr.bf16.gmra.mrb[0].mxu0 %v1518
      %v1613 = vpop.f32.mrb[0].mxu0
      %v1614 = vadd.f32 0.0, %v1613
      %v1615 = vpop.f32.mrb[0].mxu0
      %v1616 = vpop.f32.mrb[0].mxu0
      %v1617 = vadd.f32 0.0, %v1616
      %v1618 = vpop.f32.mrb[0].mxu0
      %1619 = vdwg.mxu0
      %v1620 = vadd.f32 %v1481, %v1558
      %v1621 = vadd.f32 %v1482, %v1561
      %v1622 = vadd.f32 %v1483, %v1566
      %v1623 = vadd.f32 %v1484, %v1569
      %v1624 = vadd.f32 %v1485, %v1574
      %v1625 = vadd.f32 %v1486, %v1577
      %v1626 = vadd.f32 %v1487, %v1582
      %v1627 = vadd.f32 %v1488, %v1585
      %v1628 = vadd.f32 %v1489, %v1590
      %v1629 = vadd.f32 %v1490, %v1593
      %v1630 = vadd.f32 %v1491, %v1598
      %v1631 = vadd.f32 %v1492, %v1601
      %v1632 = vadd.f32 %v1493, %v1606
      %v1633 = vadd.f32 %v1494, %v1609
      %v1634 = vadd.f32 %v1495, %v1614
      %v1635 = vadd.f32 %v1496, %v1617
      %v1636 = vld [vmem:[%s2] sm:$0x1]
      %v1638 = vlaneseq
      %v1639 = vshrl.u32 %v1638, 7
      %v1640 = vsub.s32 0, %v1639
      %v1641 = vrot.slane %v1636, %v1640
      %v1643 = vadd.f32 %v1620, %v1641
      %v1644 = vadd.f32 %v1621, %v1641
      %v1645 = vadd.f32 %v1622, %v1641
      %v1646 = vadd.f32 %v1623, %v1641
      %v1647 = vadd.f32 %v1624, %v1641
      %v1648 = vadd.f32 %v1625, %v1641
      %v1649 = vadd.f32 %v1626, %v1641
      %v1650 = vadd.f32 %v1627, %v1641
      %v1651 = vadd.f32 %v1628, %v1641
      %v1652 = vadd.f32 %v1629, %v1641
      %v1653 = vadd.f32 %v1630, %v1641
      %v1654 = vadd.f32 %v1631, %v1641
      %v1655 = vadd.f32 %v1632, %v1641
      %v1656 = vadd.f32 %v1633, %v1641
      %v1657 = vadd.f32 %v1634, %v1641
      %v1658 = vadd.f32 %v1635, %v1641
      %vm1659 = vcmask 39937
      %1660 = vst.msk [vmem:[%s206 - $0x1] sm:$0xfe] %vm1659, %v1643
      %vm1661 = vcmask 32768
      %1662 = vst.msk [vmem:[%s206 + $0x7] sm:$0x1] %vm1661, %v1644
      %1663 = vst.msk [vmem:[%s206 + $0x7] sm:$0xfe] %vm1659, %v1645
      %1664 = vst.msk [vmem:[%s206 + $0xf] sm:$0x1] %vm1661, %v1646
      %1665 = vst.msk [vmem:[%s206 + $0xf] sm:$0xfe] %vm1659, %v1647
      %1666 = vst.msk [vmem:[%s206 + $0x17] sm:$0x1] %vm1661, %v1648
      %1667 = vst.msk [vmem:[%s206 + $0x17] sm:$0xfe] %vm1659, %v1649
      %1668 = vst.msk [vmem:[%s206 + $0x1f] sm:$0x1] %vm1661, %v1650
      %1669 = vst.msk [vmem:[%s206 + $0x1f] sm:$0xfe] %vm1659, %v1651
      %1670 = vst.msk [vmem:[%s206 + $0x27] sm:$0x1] %vm1661, %v1652
      %1671 = vst.msk [vmem:[%s206 + $0x27] sm:$0xfe] %vm1659, %v1653
      %1672 = vst.msk [vmem:[%s206 + $0x2f] sm:$0x1] %vm1661, %v1654
      %1673 = vst.msk [vmem:[%s206 + $0x2f] sm:$0xfe] %vm1659, %v1655
      %1674 = vst.msk [vmem:[%s206 + $0x37] sm:$0x1] %vm1661, %v1656
      %1675 = vst.msk [vmem:[%s206 + $0x37] sm:$0xfe] %vm1659, %v1657
      %1676 = vst.msk [vmem:[%s206 + $0x3f] sm:$0x1] %vm1661, %v1658
      %s1677 = smul.u32 8, %s19
      %p1678 = scmp.lt.s32.totalorder %s18, 1
      %s1679 = scalar_select %p1678, %s18, 1
      %p1680 = scmp.lt.s32.totalorder %s1677, 7
      %s1681 = scalar_select %p1680, %s1677, 7
      %s1682 = smul.addr %s1679, 8
      %s1683 = sadd.s32 %s1681, %s1682
      %s1684 = smul.addr %s1683, 8
      %s1685 = scalar_lea.vmem %s3, %s1684
      // Predicated region
      $region33: #{tpu_custom_call.1} parent=31 // pred_check
        %p1686 = pneg %p116
      $region34: #{tpu_custom_call.1} parent=31 // pred_check_branch
        %1688 = sbr.rel (%p1686) target = $region36
      $region35: #{tpu_custom_call.1} parent=31 // pred_region
        %s1689 = smul.u32 8, %s19
      $region36: #{tpu_custom_call.1} parent=31 // pred_fallthru
        _
    $region32: #{tpu_custom_call.1} parent=5 // pred_fallthru
      _
    %p1690 = scmp.le.s32.totalorder 2, %s9
    // Predicated region
    $region37: #{tpu_custom_call.1} parent=5 // pred_check
      %p1691 = pneg %p1690
    $region38: #{tpu_custom_call.1} parent=5 // pred_check_branch
      %1693 = sbr.rel (%p1691) target = $region40
    $region39: #{tpu_custom_call.1} parent=5 // pred_region
      %s1694 = ssub.s32 %s9, 2
      // Predicated region
      $region41: #{tpu_custom_call.1} parent=39 // pred_check
        %p1695 = pneg %p122
      $region42: #{tpu_custom_call.1} parent=39 // pred_check_branch
        %1697 = sbr.rel (%p1695) target = $region44
      $region43: #{tpu_custom_call.1} parent=39 // pred_region
        %s1698 = smul.u32 8, %s21
        %p1699 = scmp.lt.s32.totalorder %s20, 1
        %s1700 = scalar_select %p1699, %s20, 1
        %p1701 = scmp.lt.s32.totalorder %s1698, 7
        %s1702 = scalar_select %p1701, %s1698, 7
        %s1703 = smul.addr %s1700, 8
        %s1704 = sadd.s32 %s1702, %s1703
        %s1705 = smul.addr %s1704, 8
        %s1706 = scalar_lea.vmem %s3, %s1705
      $region44: #{tpu_custom_call.1} parent=39 // pred_fallthru
        _
    $region40: #{tpu_custom_call.1} parent=5 // pred_fallthru
      _
  $region6: #{tpu_custom_call.1} parent=0 // loop_footer
    %s13 = sadd.s32 1, %s9
  $region7: #{tpu_custom_call.1} parent=0 // loop_footer_branch
    %8 = sbr.rel target = $region3
  $region8: #{tpu_custom_call.1} parent=0 // loop_exit
    _

</llo_original>
